<compile_context>
chip_gen: v5e
topology: v5e:2x2
jax: 0.10.0
libtpu: 0.0.40
codegen_flags: <defaults>
</compile_context>

<pallas_src>
import functools

import jax
import jax.numpy as jnp
from jax import lax
from jax.experimental import pallas as pl
from jax.experimental.pallas import tpu as pltpu


def _up_conv_kernel(xm_ref, halo_ref, w_ref, sc_ref, sh_ref, o_ref, tile_ref,
                    *, TH, W0):
    """One (batch, H-tile) grid step.

    xm_ref:   (1, TH, W0+2, Cin)   main rows of the zero-padded source image
    halo_ref: (1, 2,  W0+2, Cin)   2-row bottom halo (padded rows (h+1)*TH, +1)
    w_ref:    (9, Cin, 4*Cout)     folded sub-pixel conv weights, tap k = 3*r + s
    sc_ref:   (1, 4*Cout)          folded BN scale  (tiled over the 4 sub-pixels)
    sh_ref:   (1, 4*Cout)          folded BN shift + conv bias
    o_ref:    (1, TH*W0, 4*Cout)   output tile, channel order (ep, eq, cout)
    tile_ref: (TH+2, W0+2, Cin)    VMEM scratch: assembled padded tile
    """
    Cin = tile_ref.shape[-1]
    M = TH * W0

    # Assemble the TH+2 padded source rows this tile needs (leading-dim stores).
    tile_ref[pl.ds(0, TH), :, :] = xm_ref[0]
    tile_ref[pl.ds(TH, 2), :, :] = halo_ref[0]

    acc = jnp.zeros((M, o_ref.shape[-1]), jnp.float32)
    # 3 column shifts x 3 row shifts = 9 taps, accumulated in f32.
    for s in range(3):
        # Column-shifted slab, flattened so row-tap windows are aligned
        # sublane slices (W0 % 8 == 0 -> the reshape is layout-trivial).
        colflat = tile_ref[:, pl.ds(s, W0), :].reshape((TH + 2) * W0, Cin)
        for r in range(3):
            win = colflat[r * W0:r * W0 + M, :]                 # (M, Cin)
            acc += jnp.dot(win, w_ref[3 * r + s],
                           preferred_element_type=jnp.float32)  # (M, 4*Cout)

    out = acc * sc_ref[...] + sh_ref[...]                        # folded BN + bias
    o_ref[0] = jnp.maximum(out, 0.0).astype(o_ref.dtype)         # ReLU


def _pick_tile_rows(H0, target):
    th = min(target, H0)
    th -= th % 2                      # even, so the 2-row halo block index is exact
    while th >= 2 and (H0 % th):
        th -= 2
    if th < 2:
        raise ValueError(f"H0={H0} must have an even divisor >= 2")
    return th


def up_conv_forward(x_nchw, w_oihw, bias, gamma, beta, run_mean, run_var,
                    eps=1e-5, tile_rows=8):
    """x_nchw: (N, Cin, H0, W0) -> (N, Cout, 2*H0, 2*W0), matching the PyTorch module."""
    N, Cin, H0, W0 = x_nchw.shape
    Cout = w_oihw.shape[0]
    if W0 % 8:
        raise ValueError("W0 must be a multiple of 8")        # TODO(synk): pad W for general widths
    if H0 % 2:
        raise ValueError("H0 must be even")
    TH = _pick_tile_rows(H0, tile_rows)        # H-tile rows (at source resolution)
    Wp = W0 + 2

    # --- input: NCHW -> NHWC at SOURCE resolution + 1-px zero pad (small). ---
    x_nhwc = jnp.transpose(x_nchw.astype(jnp.float32), (0, 2, 3, 1))   # (N,H0,W0,Cin)
    xp = jnp.pad(x_nhwc, ((0, 0), (1, 1), (1, 1), (0, 0)))             # (N,H0+2,Wp,Cin)

    # --- fold the "conv-on-upsampled" 3x3 kernel into 4 sub-pixel kernels. ---
    # y[2i+ep, 2j+eq, co] = sum_{r,s,ci} xp[i+r, j+s, ci] * Wfull[r,s,ci,ep,eq,co]
    w_hwio = jnp.transpose(w_oihw.astype(jnp.float32), (2, 3, 1, 0))   # (3,3,Cin,Cout)
    A = jnp.array([[[1., 0., 0.], [0., 1., 1.]],
                   [[1., 1., 0.], [0., 0., 1.]]], jnp.float32)          # (parity, a, tap)
    E = jnp.einsum('uad,vbe,decn->uvabcn', A, A, w_hwio)                # (2,2,2,2,Cin,Cout)
    Wfull = jnp.zeros((3, 3, Cin, 2, 2, Cout), jnp.float32)
    for ep in range(2):
        for eq in range(2):
            for a in range(2):
                for b in range(2):
                    Wfull = Wfull.at[ep + a, eq + b, :, ep, eq, :].set(E[ep, eq, a, b])
    w_taps = Wfull.reshape(9, Cin, 4 * Cout)                            # tap k = 3*r + s

    # --- fold inference BatchNorm + conv bias into per-channel scale/shift. ---
    scale = (gamma / jnp.sqrt(run_var + eps)).astype(jnp.float32)       # (Cout,)
    shift = (beta - run_mean * scale + bias * scale).astype(jnp.float32)
    sc_big = jnp.tile(scale, 4).reshape(1, 4 * Cout)                    # (1, 4*Cout)
    sh_big = jnp.tile(shift, 4).reshape(1, 4 * Cout)

    kernel = functools.partial(_up_conv_kernel, TH=TH, W0=W0)
    grid = (N, H0 // TH)

    out = pl.pallas_call(
        kernel,
        out_shape=jax.ShapeDtypeStruct((N, H0 * W0, 4 * Cout), jnp.float32),
        grid_spec=pltpu.PrefetchScalarGridSpec(
            num_scalar_prefetch=0,
            grid=grid,
            in_specs=[
                # main TH rows of the padded image for this tile
                pl.BlockSpec((1, TH, Wp, Cin), lambda n, h: (n, h, 0, 0)),
                # 2-row bottom halo (rows (h+1)*TH, (h+1)*TH + 1 of the padded image)
                pl.BlockSpec((1, 2, Wp, Cin),
                             lambda n, h: (n, (h + 1) * (TH // 2), 0, 0)),
                # folded weights / BN scale / BN shift: resident across the grid
                pl.BlockSpec((9, Cin, 4 * Cout), lambda n, h: (0, 0, 0)),
                pl.BlockSpec((1, 4 * Cout), lambda n, h: (0, 0)),
                pl.BlockSpec((1, 4 * Cout), lambda n, h: (0, 0)),
            ],
            out_specs=pl.BlockSpec((1, TH * W0, 4 * Cout), lambda n, h: (n, h, 0)),
            scratch_shapes=[
                pltpu.VMEM((TH + 2, Wp, Cin), jnp.float32),   # assembled padded tile
            ],
        ),
        compiler_params=pltpu.CompilerParams(
            dimension_semantics=("parallel", "parallel")),
    )(xp, xp, w_taps, sc_big, sh_big)

    # Single output pass: (n, i*W0+j, [ep, eq, c]) -> NCHW (n, c, 2i+ep, 2j+eq).
    out = out.reshape(N, H0, W0, 2, 2, Cout)
    out = jnp.transpose(out, (0, 5, 1, 3, 2, 4))              # (N,Cout,H0,2,W0,2)
    return out.reshape(N, Cout, 2 * H0, 2 * W0).astype(x_nchw.dtype)


def _reference(x_nchw, w_oihw, bias, gamma, beta, run_mean, run_var, eps=1e-5):
    """Pure-JAX reference (nearest upsample x2, conv3x3 p1 + bias, BN eval, ReLU)."""
    x_up = jnp.repeat(jnp.repeat(x_nchw, 2, axis=2), 2, axis=3)
    y = lax.conv_general_dilated(
        x_up, w_oihw, window_strides=(1, 1), padding=((1, 1), (1, 1)),
        dimension_numbers=("NCHW", "OIHW", "NCHW"),
        precision=lax.Precision.HIGHEST)
    y = y + bias[None, :, None, None]
    y = (y - run_mean[None, :, None, None]) / jnp.sqrt(
        run_var[None, :, None, None] + eps)
    y = y * gamma[None, :, None, None] + beta[None, :, None, None]
    return jnp.maximum(y, 0.0)


if __name__ == "__main__":
    key = jax.random.PRNGKey(0)
    k_x, k_w, k_b, k_g, k_be, k_m, k_v = jax.random.split(key, 7)

    N, Cin, Cout, H0, W0 = 2, 4, 8, 16, 16     # output will be (2, 8, 32, 32)

    x = jax.random.normal(k_x, (N, Cin, H0, W0), jnp.float32)
    w = jax.random.normal(k_w, (Cout, Cin, 3, 3), jnp.float32) * 0.1
    bias = jax.random.normal(k_b, (Cout,), jnp.float32) * 0.1
    gamma = 1.0 + 0.1 * jax.random.normal(k_g, (Cout,), jnp.float32)
    beta = 0.1 * jax.random.normal(k_be, (Cout,), jnp.float32)
    run_mean = 0.1 * jax.random.normal(k_m, (Cout,), jnp.float32)
    run_var = jnp.abs(jax.random.normal(k_v, (Cout,), jnp.float32)) + 0.5

    out = up_conv_forward(x, w, bias, gamma, beta, run_mean, run_var)
    out = jax.block_until_ready(out)

    ref = _reference(x, w, bias, gamma, beta, run_mean, run_var)
    assert out.shape == (N, Cout, 2 * H0, 2 * W0), out.shape
    assert jnp.allclose(out, ref, atol=2e-2, rtol=2e-2), "mismatch vs reference"

    print("KERNEL_OK")
</pallas_src>

<mosaic_0001>
module attributes {stable_mosaic.version = 11 : i64} {
  func.func @_up_conv_kernel(%arg0: i32, %arg1: i32, %arg2: memref<1x8x18x4xf32, #tpu.memory_space<vmem>>, %arg3: memref<1x2x18x4xf32, #tpu.memory_space<vmem>>, %arg4: memref<9x4x32xf32, #tpu.memory_space<vmem>>, %arg5: memref<1x32xf32, #tpu.memory_space<vmem>>, %arg6: memref<1x32xf32, #tpu.memory_space<vmem>>, %arg7: memref<1x128x32xf32, #tpu.memory_space<vmem>>, %arg8: memref<10x18x4xf32, #tpu.memory_space<vmem>>) attributes {dimension_semantics = [#tpu.dimension_semantics<parallel>, #tpu.dimension_semantics<parallel>], iteration_bounds = array<i64: 2, 2>, scalar_prefetch = 0 : i64, scratch_operands = 1 : i64, tpu.core_type = #tpu.core_type<tc>, window_params = [{transform_indices = @transform_0, window_bounds = array<i64: 1, 8, 18, 4>}, {transform_indices = @transform_1, window_bounds = array<i64: 1, 2, 18, 4>}, {pipeline_mode = #tpu.pipeline_mode<synchronous>, transform_indices = @transform_2, window_bounds = array<i64: 9, 4, 32>}, {pipeline_mode = #tpu.pipeline_mode<synchronous>, transform_indices = @transform_3, window_bounds = array<i64: 1, 32>}, {pipeline_mode = #tpu.pipeline_mode<synchronous>, transform_indices = @transform_4, window_bounds = array<i64: 1, 32>}, {transform_indices = @transform_5, window_bounds = array<i64: 1, 128, 32>}]} {
    %c0 = arith.constant 0 : index
    %c0_0 = arith.constant 0 : index
    %c0_1 = arith.constant 0 : index
    %c0_2 = arith.constant 0 : index
    %0 = vector.load %arg2[%c0, %c0_0, %c0_1, %c0_2] : memref<1x8x18x4xf32, #tpu.memory_space<vmem>>, vector<1x8x18x4xf32>
    %1 = vector.shape_cast %0 : vector<1x8x18x4xf32> to vector<8x18x4xf32>
    %c0_3 = arith.constant 0 : index
    %c0_4 = arith.constant 0 : index
    %c0_5 = arith.constant 0 : index
    %2 = vector.load %arg8[%c0_3, %c0_4, %c0_5] : memref<10x18x4xf32, #tpu.memory_space<vmem>>, vector<8x18x4xf32>
    tpu.vector_store %arg8[%c0_3, %c0_4, %c0_5], %1 {strides = array<i32>} : memref<10x18x4xf32, #tpu.memory_space<vmem>>, vector<8x18x4xf32>,
    %c0_6 = arith.constant 0 : index
    %c0_7 = arith.constant 0 : index
    %c0_8 = arith.constant 0 : index
    %c0_9 = arith.constant 0 : index
    %3 = vector.load %arg3[%c0_6, %c0_7, %c0_8, %c0_9] : memref<1x2x18x4xf32, #tpu.memory_space<vmem>>, vector<1x2x18x4xf32>
    %4 = vector.shape_cast %3 : vector<1x2x18x4xf32> to vector<2x18x4xf32>
    %c8 = arith.constant 8 : index
    %c0_10 = arith.constant 0 : index
    %c0_11 = arith.constant 0 : index
    %5 = vector.load %arg8[%c8, %c0_10, %c0_11] : memref<10x18x4xf32, #tpu.memory_space<vmem>>, vector<2x18x4xf32>
    tpu.vector_store %arg8[%c8, %c0_10, %c0_11], %4 {strides = array<i32>} : memref<10x18x4xf32, #tpu.memory_space<vmem>>, vector<2x18x4xf32>,
    %cst = arith.constant 0.000000e+00 : f32
    %6 = vector.broadcast %cst : f32 to vector<128x32xf32>
    %c0_12 = arith.constant 0 : index
    %c0_13 = arith.constant 0 : index
    %c0_14 = arith.constant 0 : index
    %7 = vector.load %arg8[%c0_12, %c0_13, %c0_14] : memref<10x18x4xf32, #tpu.memory_space<vmem>>, vector<10x16x4xf32>
    %8 = vector.shape_cast %7 : vector<10x16x4xf32> to vector<160x4xf32>
    %9 = vector.extract_strided_slice %8 {offsets = [0, 0], sizes = [128, 4], strides = [1, 1]} : vector<160x4xf32> to vector<128x4xf32>
    %c0_15 = arith.constant 0 : index
    %c0_16 = arith.constant 0 : index
    %c0_17 = arith.constant 0 : index
    %10 = vector.load %arg4[%c0_15, %c0_16, %c0_17] : memref<9x4x32xf32, #tpu.memory_space<vmem>>, vector<1x4x32xf32>
    %11 = vector.shape_cast %10 : vector<1x4x32xf32> to vector<4x32xf32>
    %cst_18 = arith.constant dense<0.000000e+00> : vector<128x32xf32>
    %12 = tpu.matmul %9, %11, %cst_18 {dimension_numbers = #tpu.dot_dimension_numbers<[1], [0], [0], [1], [0, 0, 1, 1], [], []>} : vector<128x4xf32>, vector<4x32xf32>, vector<128x32xf32> -> vector<128x32xf32>
    %13 = arith.addf %6, %12 : vector<128x32xf32>
    %14 = vector.extract_strided_slice %8 {offsets = [16, 0], sizes = [128, 4], strides = [1, 1]} : vector<160x4xf32> to vector<128x4xf32>
    %c3 = arith.constant 3 : index
    %c0_19 = arith.constant 0 : index
    %c0_20 = arith.constant 0 : index
    %15 = vector.load %arg4[%c3, %c0_19, %c0_20] : memref<9x4x32xf32, #tpu.memory_space<vmem>>, vector<1x4x32xf32>
    %16 = vector.shape_cast %15 : vector<1x4x32xf32> to vector<4x32xf32>
    %cst_21 = arith.constant dense<0.000000e+00> : vector<128x32xf32>
    %17 = tpu.matmul %14, %16, %cst_21 {dimension_numbers = #tpu.dot_dimension_numbers<[1], [0], [0], [1], [0, 0, 1, 1], [], []>} : vector<128x4xf32>, vector<4x32xf32>, vector<128x32xf32> -> vector<128x32xf32>
    %18 = arith.addf %13, %17 : vector<128x32xf32>
    %19 = vector.extract_strided_slice %8 {offsets = [32, 0], sizes = [128, 4], strides = [1, 1]} : vector<160x4xf32> to vector<128x4xf32>
    %c6 = arith.constant 6 : index
    %c0_22 = arith.constant 0 : index
    %c0_23 = arith.constant 0 : index
    %20 = vector.load %arg4[%c6, %c0_22, %c0_23] : memref<9x4x32xf32, #tpu.memory_space<vmem>>, vector<1x4x32xf32>
    %21 = vector.shape_cast %20 : vector<1x4x32xf32> to vector<4x32xf32>
    %cst_24 = arith.constant dense<0.000000e+00> : vector<128x32xf32>
    %22 = tpu.matmul %19, %21, %cst_24 {dimension_numbers = #tpu.dot_dimension_numbers<[1], [0], [0], [1], [0, 0, 1, 1], [], []>} : vector<128x4xf32>, vector<4x32xf32>, vector<128x32xf32> -> vector<128x32xf32>
    %23 = arith.addf %18, %22 : vector<128x32xf32>
    %c0_25 = arith.constant 0 : index
    %c1 = arith.constant 1 : index
    %c0_26 = arith.constant 0 : index
    %24 = vector.load %arg8[%c0_25, %c1, %c0_26] : memref<10x18x4xf32, #tpu.memory_space<vmem>>, vector<10x16x4xf32>
    %25 = vector.shape_cast %24 : vector<10x16x4xf32> to vector<160x4xf32>
    %26 = vector.extract_strided_slice %25 {offsets = [0, 0], sizes = [128, 4], strides = [1, 1]} : vector<160x4xf32> to vector<128x4xf32>
    %c1_27 = arith.constant 1 : index
    %c0_28 = arith.constant 0 : index
    %c0_29 = arith.constant 0 : index
    %27 = vector.load %arg4[%c1_27, %c0_28, %c0_29] : memref<9x4x32xf32, #tpu.memory_space<vmem>>, vector<1x4x32xf32>
    %28 = vector.shape_cast %27 : vector<1x4x32xf32> to vector<4x32xf32>
    %cst_30 = arith.constant dense<0.000000e+00> : vector<128x32xf32>
    %29 = tpu.matmul %26, %28, %cst_30 {dimension_numbers = #tpu.dot_dimension_numbers<[1], [0], [0], [1], [0, 0, 1, 1], [], []>} : vector<128x4xf32>, vector<4x32xf32>, vector<128x32xf32> -> vector<128x32xf32>
    %30 = arith.addf %23, %29 : vector<128x32xf32>
    %31 = vector.extract_strided_slice %25 {offsets = [16, 0], sizes = [128, 4], strides = [1, 1]} : vector<160x4xf32> to vector<128x4xf32>
    %c4 = arith.constant 4 : index
    %c0_31 = arith.constant 0 : index
    %c0_32 = arith.constant 0 : index
    %32 = vector.load %arg4[%c4, %c0_31, %c0_32] : memref<9x4x32xf32, #tpu.memory_space<vmem>>, vector<1x4x32xf32>
    %33 = vector.shape_cast %32 : vector<1x4x32xf32> to vector<4x32xf32>
    %cst_33 = arith.constant dense<0.000000e+00> : vector<128x32xf32>
    %34 = tpu.matmul %31, %33, %cst_33 {dimension_numbers = #tpu.dot_dimension_numbers<[1], [0], [0], [1], [0, 0, 1, 1], [], []>} : vector<128x4xf32>, vector<4x32xf32>, vector<128x32xf32> -> vector<128x32xf32>
    %35 = arith.addf %30, %34 : vector<128x32xf32>
    %36 = vector.extract_strided_slice %25 {offsets = [32, 0], sizes = [128, 4], strides = [1, 1]} : vector<160x4xf32> to vector<128x4xf32>
    %c7 = arith.constant 7 : index
    %c0_34 = arith.constant 0 : index
    %c0_35 = arith.constant 0 : index
    %37 = vector.load %arg4[%c7, %c0_34, %c0_35] : memref<9x4x32xf32, #tpu.memory_space<vmem>>, vector<1x4x32xf32>
    %38 = vector.shape_cast %37 : vector<1x4x32xf32> to vector<4x32xf32>
    %cst_36 = arith.constant dense<0.000000e+00> : vector<128x32xf32>
    %39 = tpu.matmul %36, %38, %cst_36 {dimension_numbers = #tpu.dot_dimension_numbers<[1], [0], [0], [1], [0, 0, 1, 1], [], []>} : vector<128x4xf32>, vector<4x32xf32>, vector<128x32xf32> -> vector<128x32xf32>
    %40 = arith.addf %35, %39 : vector<128x32xf32>
    %c0_37 = arith.constant 0 : index
    %c2 = arith.constant 2 : index
    %c0_38 = arith.constant 0 : index
    %41 = vector.load %arg8[%c0_37, %c2, %c0_38] : memref<10x18x4xf32, #tpu.memory_space<vmem>>, vector<10x16x4xf32>
    %42 = vector.shape_cast %41 : vector<10x16x4xf32> to vector<160x4xf32>
    %43 = vector.extract_strided_slice %42 {offsets = [0, 0], sizes = [128, 4], strides = [1, 1]} : vector<160x4xf32> to vector<128x4xf32>
    %c2_39 = arith.constant 2 : index
    %c0_40 = arith.constant 0 : index
    %c0_41 = arith.constant 0 : index
    %44 = vector.load %arg4[%c2_39, %c0_40, %c0_41] : memref<9x4x32xf32, #tpu.memory_space<vmem>>, vector<1x4x32xf32>
    %45 = vector.shape_cast %44 : vector<1x4x32xf32> to vector<4x32xf32>
    %cst_42 = arith.constant dense<0.000000e+00> : vector<128x32xf32>
    %46 = tpu.matmul %43, %45, %cst_42 {dimension_numbers = #tpu.dot_dimension_numbers<[1], [0], [0], [1], [0, 0, 1, 1], [], []>} : vector<128x4xf32>, vector<4x32xf32>, vector<128x32xf32> -> vector<128x32xf32>
    %47 = arith.addf %40, %46 : vector<128x32xf32>
    %48 = vector.extract_strided_slice %42 {offsets = [16, 0], sizes = [128, 4], strides = [1, 1]} : vector<160x4xf32> to vector<128x4xf32>
    %c5 = arith.constant 5 : index
    %c0_43 = arith.constant 0 : index
    %c0_44 = arith.constant 0 : index
    %49 = vector.load %arg4[%c5, %c0_43, %c0_44] : memref<9x4x32xf32, #tpu.memory_space<vmem>>, vector<1x4x32xf32>
    %50 = vector.shape_cast %49 : vector<1x4x32xf32> to vector<4x32xf32>
    %cst_45 = arith.constant dense<0.000000e+00> : vector<128x32xf32>
    %51 = tpu.matmul %48, %50, %cst_45 {dimension_numbers = #tpu.dot_dimension_numbers<[1], [0], [0], [1], [0, 0, 1, 1], [], []>} : vector<128x4xf32>, vector<4x32xf32>, vector<128x32xf32> -> vector<128x32xf32>
    %52 = arith.addf %47, %51 : vector<128x32xf32>
    %53 = vector.extract_strided_slice %42 {offsets = [32, 0], sizes = [128, 4], strides = [1, 1]} : vector<160x4xf32> to vector<128x4xf32>
    %c8_46 = arith.constant 8 : index
    %c0_47 = arith.constant 0 : index
    %c0_48 = arith.constant 0 : index
    %54 = vector.load %arg4[%c8_46, %c0_47, %c0_48] : memref<9x4x32xf32, #tpu.memory_space<vmem>>, vector<1x4x32xf32>
    %55 = vector.shape_cast %54 : vector<1x4x32xf32> to vector<4x32xf32>
    %cst_49 = arith.constant dense<0.000000e+00> : vector<128x32xf32>
    %56 = tpu.matmul %53, %55, %cst_49 {dimension_numbers = #tpu.dot_dimension_numbers<[1], [0], [0], [1], [0, 0, 1, 1], [], []>} : vector<128x4xf32>, vector<4x32xf32>, vector<128x32xf32> -> vector<128x32xf32>
    %57 = arith.addf %52, %56 : vector<128x32xf32>
    %c0_50 = arith.constant 0 : index
    %c0_51 = arith.constant 0 : index
    %58 = vector.load %arg5[%c0_50, %c0_51] : memref<1x32xf32, #tpu.memory_space<vmem>>, vector<1x32xf32>
    %59 = vector.broadcast %58 : vector<1x32xf32> to vector<128x32xf32>
    %60 = arith.mulf %57, %59 : vector<128x32xf32>
    %c0_52 = arith.constant 0 : index
    %c0_53 = arith.constant 0 : index
    %61 = vector.load %arg6[%c0_52, %c0_53] : memref<1x32xf32, #tpu.memory_space<vmem>>, vector<1x32xf32>
    %62 = vector.broadcast %61 : vector<1x32xf32> to vector<128x32xf32>
    %63 = arith.addf %60, %62 : vector<128x32xf32>
    %cst_54 = arith.constant 0.000000e+00 : f32
    %64 = vector.broadcast %cst_54 : f32 to vector<128x32xf32>
    %65 = arith.maximumf %63, %64 : vector<128x32xf32>
    %c0_55 = arith.constant 0 : index
    %c0_56 = arith.constant 0 : index
    %c0_57 = arith.constant 0 : index
    %66 = vector.load %arg7[%c0_55, %c0_56, %c0_57] : memref<1x128x32xf32, #tpu.memory_space<vmem>>, vector<1x128x32xf32>
    %67 = vector.shape_cast %66 : vector<1x128x32xf32> to vector<128x32xf32>
    %68 = vector.shape_cast %65 : vector<128x32xf32> to vector<1x128x32xf32>
    tpu.vector_store %arg7[%c0_55, %c0_56, %c0_57], %68 {strides = array<i32>} : memref<1x128x32xf32, #tpu.memory_space<vmem>>, vector<1x128x32xf32>,
    return
  }
  func.func @transform_0(%arg0: i32, %arg1: i32) -> (i32, i32, i32, i32) {
    %c0_i32 = arith.constant 0 : i32
    %c0_i32_0 = arith.constant 0 : i32
    %c0_i32_1 = arith.constant 0 : i32
    return %arg0, %arg1, %c0_i32, %c0_i32_0 : i32, i32, i32, i32
  }
  func.func @transform_1(%arg0: i32, %arg1: i32) -> (i32, i32, i32, i32) {
    %c1_i32 = arith.constant 1 : i32
    %0 = arith.addi %arg1, %c1_i32 : i32
    %c4_i32 = arith.constant 4 : i32
    %1 = arith.muli %0, %c4_i32 : i32
    %c0_i32 = arith.constant 0 : i32
    %c0_i32_0 = arith.constant 0 : i32
    %c0_i32_1 = arith.constant 0 : i32
    return %arg0, %1, %c0_i32, %c0_i32_0 : i32, i32, i32, i32
  }
  func.func @transform_2(%arg0: i32, %arg1: i32) -> (i32, i32, i32) {
    %c0_i32 = arith.constant 0 : i32
    %c0_i32_0 = arith.constant 0 : i32
    %c0_i32_1 = arith.constant 0 : i32
    %c0_i32_2 = arith.constant 0 : i32
    return %c0_i32, %c0_i32_0, %c0_i32_1 : i32, i32, i32
  }
  func.func @transform_3(%arg0: i32, %arg1: i32) -> (i32, i32) {
    %c0_i32 = arith.constant 0 : i32
    %c0_i32_0 = arith.constant 0 : i32
    %c0_i32_1 = arith.constant 0 : i32
    return %c0_i32, %c0_i32_0 : i32, i32
  }
  func.func @transform_4(%arg0: i32, %arg1: i32) -> (i32, i32) {
    %c0_i32 = arith.constant 0 : i32
    %c0_i32_0 = arith.constant 0 : i32
    %c0_i32_1 = arith.constant 0 : i32
    return %c0_i32, %c0_i32_0 : i32, i32
  }
  func.func @transform_5(%arg0: i32, %arg1: i32) -> (i32, i32, i32) {
    %c0_i32 = arith.constant 0 : i32
    %c0_i32_0 = arith.constant 0 : i32
    return %arg0, %arg1, %c0_i32 : i32, i32, i32
  }
}

</mosaic_0001>

<llo_original>
// kernel: tpu_custom_call.1
$region0: #{tpu_custom_call.1}
  #allocation0 [shape = 'u32[]', space=smem, size = 0x4, offset = 0x4, fixed_abs, tag = 'smem constant byte address 0x4 - core index']
  #allocation1 [shape = 'u32[72,128]{1,0:T(1,128)}', space=vmem, size = 0x9000, scoped, tag = 'internal scratch']
  #allocation2 [shape = 'f32[10,18,4]{2,1,0:T(8,128)}', space=vmem, size = 0x1e000, scoped, tag = 'scratch operand']
  %s0 = inlined_call_operand.vmem [shape: f32[2,18,18,4], index: 0, kind: input, shape index: {}]
  %s1 = inlined_call_operand.vmem [shape: f32[2,18,18,4], index: 1, kind: input, shape index: {}]
  %s2 = inlined_call_operand.vmem [shape: f32[9,4,32], index: 2, kind: input, shape index: {}]
  %s3 = inlined_call_operand.vmem [shape: f32[1,32], index: 3, kind: input, shape index: {}]
  %s4 = inlined_call_operand.vmem [shape: f32[1,32], index: 4, kind: input, shape index: {}]
  %s5 = inlined_call_operand.vmem [shape: f32[2,256,32], index: 5, kind: output, shape index: {}]
  %s6 = sld [smem:[#allocation0]]
  $region53: #{tpu_custom_call.1} parent=0
    _
  %s8 = ssub.s32 1, %s6
  %s9 = scalar_select 0, %s8, %s6
  loop: start=0, step=1, limit=6
  $region2: #{tpu_custom_call.1} parent=0 // loop_pre_header
    _
  $region3: #{tpu_custom_call.1} parent=0 // loop_header
    %s11 = sphi 0, %s15
    %p12 = scmp.ge.s32.totalorder %s11, 6
    %s18 = sphi 0, %s30
    %s19 = sphi 0, %s26
    %s20 = sphi 0, %s18
    %s21 = sphi 0, %s19
    %s22 = sphi 0, %s20
    %s23 = sphi 0, %s21
    %s35 = sphi 0, %s37
    %s38 = sphi 0, %s35
    %s39 = sphi 0, %s38
    %s55 = sphi 0, %s39
    %s67 = sphi 0, %s69
    %s70 = sphi 0, %s67
    %s71 = sphi 0, %s70
    %s87 = sphi 0, %s71
    %s91 = sphi 0, %s91
    %s93 = sphi 0, %s91
    %s94 = sphi 0, %s93
    %s108 = sphi 0, %s94
    %s112 = sphi 0, %s112
    %s114 = sphi 0, %s112
    %s115 = sphi 0, %s114
    %s129 = sphi 0, %s115
    %s133 = sphi 0, %s133
    %s135 = sphi 0, %s133
    %s136 = sphi 0, %s135
    %s150 = sphi 0, %s136
    %s158 = sphi 0, %s160
    %s161 = sphi 0, %s158
    %s162 = sphi 0, %s161
    %s178 = sphi 0, %s162
  $region4: #{tpu_custom_call.1} parent=0 // loop_header_branch
    %14 = sbr.rel (%p12) target = $region8
  $region5: #{tpu_custom_call.1} parent=0 // loop_body
    %s16 = ssub.s32 %s11, 1
    %s17 = ssub.s32 %s11, 2
    %s24 = sadd.s32 1, %s19
    %p25 = scmp.ge.s32.totalorder %s24, 2
    %s26 = scalar_select %p25, 0, %s24
    %s27 = sadd.s32 1, %s18
    %s28 = scalar_select %p25, %s27, %s18
    %p29 = scmp.ge.s32.totalorder %s28, 2
    %s30 = scalar_select %p29, 0, %s28
    %s31 = ssub.s32 %s18, %s30
    %s32 = ssub.s32 %s19, %s26
    %s33 = sor.u32 %s31, %s32
    %p34 = scmp.eq.s32.totalorder %s33, 0
    %s36 = sadd.s32 %s35, 1
    %s37 = scalar_select %p34, %s35, %s36
    %p40 = pneg %p34
    %p41 = scmp.eq.s32.totalorder %s11, 3
    %p42 = por %p40, %p41
    %p43 = scmp.ne.s32.totalorder %s35, %s38
    %p44 = scmp.eq.s32.totalorder %s11, 0
    %p45 = por %p43, %p44
    %p46 = scmp.ne.s32.totalorder %s35, %s38
    %p47 = scmp.eq.s32.totalorder %s16, 3
    %p48 = por %p46, %p47
    %p49 = scmp.ne.s32.totalorder %s38, %s39
    %p50 = scmp.eq.s32.totalorder %s16, 0
    %p51 = por %p49, %p50
    %p52 = scmp.ne.s32.totalorder %s38, %s39
    %p53 = scmp.eq.s32.totalorder %s17, 3
    %p54 = por %p52, %p53
    %p56 = scmp.ne.s32.totalorder %s39, %s55
    %p57 = scmp.eq.s32.totalorder %s17, 0
    %p58 = por %p56, %p57
    %s59 = sadd.s32 %s19, 1
    %s60 = smul.u32 %s59, 4
    %s61 = sadd.s32 %s26, 1
    %s62 = smul.u32 %s61, 4
    %s63 = ssub.s32 %s18, %s30
    %s64 = ssub.s32 %s60, %s62
    %s65 = sor.u32 %s63, %s64
    %p66 = scmp.eq.s32.totalorder %s65, 0
    %s68 = sadd.s32 %s67, 1
    %s69 = scalar_select %p66, %s67, %s68
    %p72 = pneg %p66
    %p73 = scmp.eq.s32.totalorder %s11, 3
    %p74 = por %p72, %p73
    %p75 = scmp.ne.s32.totalorder %s67, %s70
    %p76 = scmp.eq.s32.totalorder %s11, 0
    %p77 = por %p75, %p76
    %p78 = scmp.ne.s32.totalorder %s67, %s70
    %p79 = scmp.eq.s32.totalorder %s16, 3
    %p80 = por %p78, %p79
    %p81 = scmp.ne.s32.totalorder %s70, %s71
    %p82 = scmp.eq.s32.totalorder %s16, 0
    %p83 = por %p81, %p82
    %p84 = scmp.ne.s32.totalorder %s70, %s71
    %p85 = scmp.eq.s32.totalorder %s17, 3
    %p86 = por %p84, %p85
    %p88 = scmp.ne.s32.totalorder %s71, %s87
    %p89 = scmp.eq.s32.totalorder %s17, 0
    %p90 = por %p88, %p89
    %s92 = sadd.s32 %s91, 1
    %p95 = scmp.eq.s32.totalorder %s11, 3
    %p96 = scmp.ne.s32.totalorder %s91, %s93
    %p97 = scmp.eq.s32.totalorder %s11, 0
    %p98 = por %p96, %p97
    %p99 = scmp.ne.s32.totalorder %s91, %s93
    %p100 = scmp.eq.s32.totalorder %s16, 3
    %p101 = por %p99, %p100
    %p102 = scmp.ne.s32.totalorder %s93, %s94
    %p103 = scmp.eq.s32.totalorder %s16, 0
    %p104 = por %p102, %p103
    %p105 = scmp.ne.s32.totalorder %s93, %s94
    %p106 = scmp.eq.s32.totalorder %s17, 3
    %p107 = por %p105, %p106
    %p109 = scmp.ne.s32.totalorder %s94, %s108
    %p110 = scmp.eq.s32.totalorder %s17, 0
    %p111 = por %p109, %p110
    %s113 = sadd.s32 %s112, 1
    %p116 = scmp.eq.s32.totalorder %s11, 3
    %p117 = scmp.ne.s32.totalorder %s112, %s114
    %p118 = scmp.eq.s32.totalorder %s11, 0
    %p119 = por %p117, %p118
    %p120 = scmp.ne.s32.totalorder %s112, %s114
    %p121 = scmp.eq.s32.totalorder %s16, 3
    %p122 = por %p120, %p121
    %p123 = scmp.ne.s32.totalorder %s114, %s115
    %p124 = scmp.eq.s32.totalorder %s16, 0
    %p125 = por %p123, %p124
    %p126 = scmp.ne.s32.totalorder %s114, %s115
    %p127 = scmp.eq.s32.totalorder %s17, 3
    %p128 = por %p126, %p127
    %p130 = scmp.ne.s32.totalorder %s115, %s129
    %p131 = scmp.eq.s32.totalorder %s17, 0
    %p132 = por %p130, %p131
    %s134 = sadd.s32 %s133, 1
    %p137 = scmp.eq.s32.totalorder %s11, 3
    %p138 = scmp.ne.s32.totalorder %s133, %s135
    %p139 = scmp.eq.s32.totalorder %s11, 0
    %p140 = por %p138, %p139
    %p141 = scmp.ne.s32.totalorder %s133, %s135
    %p142 = scmp.eq.s32.totalorder %s16, 3
    %p143 = por %p141, %p142
    %p144 = scmp.ne.s32.totalorder %s135, %s136
    %p145 = scmp.eq.s32.totalorder %s16, 0
    %p146 = por %p144, %p145
    %p147 = scmp.ne.s32.totalorder %s135, %s136
    %p148 = scmp.eq.s32.totalorder %s17, 3
    %p149 = por %p147, %p148
    %p151 = scmp.ne.s32.totalorder %s136, %s150
    %p152 = scmp.eq.s32.totalorder %s17, 0
    %p153 = por %p151, %p152
    %s154 = ssub.s32 %s18, %s30
    %s155 = ssub.s32 %s19, %s26
    %s156 = sor.u32 %s154, %s155
    %p157 = scmp.eq.s32.totalorder %s156, 0
    %s159 = sadd.s32 %s158, 1
    %s160 = scalar_select %p157, %s158, %s159
    %p163 = pneg %p157
    %p164 = scmp.eq.s32.totalorder %s11, 3
    %p165 = por %p163, %p164
    %p166 = scmp.ne.s32.totalorder %s158, %s161
    %p167 = scmp.eq.s32.totalorder %s11, 0
    %p168 = por %p166, %p167
    %p169 = scmp.ne.s32.totalorder %s158, %s161
    %p170 = scmp.eq.s32.totalorder %s16, 3
    %p171 = por %p169, %p170
    %p172 = scmp.ne.s32.totalorder %s161, %s162
    %p173 = scmp.eq.s32.totalorder %s16, 0
    %p174 = por %p172, %p173
    %p175 = scmp.ne.s32.totalorder %s161, %s162
    %p176 = scmp.eq.s32.totalorder %s17, 3
    %p177 = por %p175, %p176
    %p179 = scmp.ne.s32.totalorder %s162, %s178
    %p180 = scmp.eq.s32.totalorder %s17, 0
    %p181 = por %p179, %p180
    %p182 = scmp.le.s32.totalorder 1, %s11
    %p183 = scmp.lt.s32.totalorder %s11, 5
    %p184 = pnand %p182, %p183
    %p185 = pneg %p184
    // Predicated region
    $region9: #{tpu_custom_call.1} parent=5 // pred_check
      _
    $region10: #{tpu_custom_call.1} parent=5 // pred_check_branch
      %187 = sbr.rel (%p184) target = $region12
    $region11: #{tpu_custom_call.1} parent=5 // pred_region
      %s188 = ssub.s32 %s11, 1
      // Predicated region
      $region13: #{tpu_custom_call.1} parent=11 // pred_check
        %p189 = pneg %p104
      $region14: #{tpu_custom_call.1} parent=11 // pred_check_branch
        %191 = sbr.rel (%p189) target = $region16
      $region15: #{tpu_custom_call.1} parent=11 // pred_region
        _
      $region16: #{tpu_custom_call.1} parent=11 // pred_fallthru
        _
      // Predicated region
      $region17: #{tpu_custom_call.1} parent=11 // pred_check
        %p192 = pneg %p125
      $region18: #{tpu_custom_call.1} parent=11 // pred_check_branch
        %194 = sbr.rel (%p192) target = $region20
      $region19: #{tpu_custom_call.1} parent=11 // pred_region
        _
      $region20: #{tpu_custom_call.1} parent=11 // pred_fallthru
        _
      // Predicated region
      $region21: #{tpu_custom_call.1} parent=11 // pred_check
        %p195 = pneg %p146
      $region22: #{tpu_custom_call.1} parent=11 // pred_check_branch
        %197 = sbr.rel (%p195) target = $region24
      $region23: #{tpu_custom_call.1} parent=11 // pred_region
        _
      $region24: #{tpu_custom_call.1} parent=11 // pred_fallthru
        _
    $region12: #{tpu_custom_call.1} parent=5 // pred_fallthru
      _
    %p198 = scmp.lt.s32.totalorder %s11, 4
    // Predicated region
    $region25: #{tpu_custom_call.1} parent=5 // pred_check
      %p199 = pneg %p198
    $region26: #{tpu_custom_call.1} parent=5 // pred_check_branch
      %201 = sbr.rel (%p199) target = $region28
    $region27: #{tpu_custom_call.1} parent=5 // pred_region
      // Predicated region
      $region29: #{tpu_custom_call.1} parent=27 // pred_check
        %p202 = pneg %p45
      $region30: #{tpu_custom_call.1} parent=27 // pred_check_branch
        %204 = sbr.rel (%p202) target = $region32
      $region31: #{tpu_custom_call.1} parent=27 // pred_region
        %s205 = smul.u32 8, %s19
        %s206 = ssub.s32 18, %s205
        %p207 = scmp.lt.s32.totalorder %s206, 8
        %s208 = scalar_select %p207, %s206, 8
        %s209 = smul.u32 8, %s208
        %s210 = smul.u32 %s209, 3
        %p211 = scmp.lt.s32.totalorder %s18, 1
        %s212 = scalar_select %p211, %s18, 1
        %p213 = scmp.lt.s32.totalorder %s205, 17
        %s214 = scalar_select %p213, %s205, 17
        %s215 = smul.addr %s214, 3
        %s216 = smul.addr %s212, 54
        %s217 = sadd.s32 %s215, %s216
        %s218 = smul.addr %s217, 8
        %s219 = scalar_lea.vmem %s0, %s218
        %s220 = smul.u32 8, %s19
        %s221 = ssub.s32 18, %s220
        %p222 = scmp.lt.s32.totalorder %s221, 8
        %s223 = scalar_select %p222, %s221, 8
        %s224 = smul.u32 8, %s223
        %s225 = smul.u32 %s224, 3
      $region32: #{tpu_custom_call.1} parent=27 // pred_fallthru
        _
      // Predicated region
      $region33: #{tpu_custom_call.1} parent=27 // pred_check
        %p226 = pneg %p77
      $region34: #{tpu_custom_call.1} parent=27 // pred_check_branch
        %228 = sbr.rel (%p226) target = $region36
      $region35: #{tpu_custom_call.1} parent=27 // pred_region
        %s229 = sadd.s32 %s19, 1
        %s230 = smul.u32 %s229, 4
        %s231 = smul.u32 2, %s230
        %p232 = scmp.lt.s32.totalorder %s18, 1
        %s233 = scalar_select %p232, %s18, 1
        %p234 = scmp.lt.s32.totalorder %s231, 17
        %s235 = scalar_select %p234, %s231, 17
        %s236 = smul.addr %s235, 3
        %s237 = smul.addr %s233, 54
        %s238 = sadd.s32 %s236, %s237
        %s239 = smul.addr %s238, 8
        %s240 = scalar_lea.vmem %s1, %s239
        %s241 = sadd.s32 %s19, 1
        %s242 = smul.u32 %s241, 4
        %s243 = smul.u32 2, %s242
      $region36: #{tpu_custom_call.1} parent=27 // pred_fallthru
        _
    $region28: #{tpu_custom_call.1} parent=5 // pred_fallthru
      _
    %p244 = scmp.le.s32.totalorder 1, %s11
    %p245 = scmp.lt.s32.totalorder %s11, 5
    %p246 = pnand %p244, %p245
    %p247 = pneg %p246
    // Predicated region
    $region37: #{tpu_custom_call.1} parent=5 // pred_check
      _
    $region38: #{tpu_custom_call.1} parent=5 // pred_check_branch
      %249 = sbr.rel (%p246) target = $region40
    $region39: #{tpu_custom_call.1} parent=5 // pred_region
      %s250 = ssub.s32 %s11, 1
      %s251 = smul.u32 8, %s21
      %s252 = ssub.s32 18, %s251
      %p253 = scmp.lt.s32.totalorder %s252, 8
      %s254 = scalar_select %p253, %s252, 8
      %s255 = smul.u32 8, %s254
      %s256 = smul.u32 %s255, 3
      %p257 = scmp.lt.s32.totalorder %s20, 1
      %s258 = scalar_select %p257, %s20, 1
      %p259 = scmp.lt.s32.totalorder %s251, 17
      %s260 = scalar_select %p259, %s251, 17
      %s261 = smul.addr %s260, 3
      %s262 = smul.addr %s258, 54
      %s263 = sadd.s32 %s261, %s262
      %s264 = smul.addr %s263, 8
      %s265 = scalar_lea.vmem %s0, %s264
      %p266 = pneg %p51
      %p267 = pneg %p48
      %s268 = sadd.s32 %s21, 1
      %s269 = smul.u32 %s268, 4
      %s270 = smul.u32 2, %s269
      %p271 = scmp.lt.s32.totalorder %s20, 1
      %s272 = scalar_select %p271, %s20, 1
      %p273 = scmp.lt.s32.totalorder %s270, 17
      %s274 = scalar_select %p273, %s270, 17
      %s275 = smul.addr %s274, 3
      %s276 = smul.addr %s272, 54
      %s277 = sadd.s32 %s275, %s276
      %s278 = smul.addr %s277, 8
      %s279 = scalar_lea.vmem %s1, %s278
      %p280 = pneg %p83
      %p281 = pneg %p80
      %p282 = pneg %p104
      %p283 = pneg %p101
      %p284 = pneg %p125
      %p285 = pneg %p122
      %p286 = pneg %p146
      %p287 = pneg %p143
      %p288 = pneg %p174
      %p289 = pneg %p171
      %s290 = smul.u32 16, %s21
      %p291 = scmp.lt.s32.totalorder %s20, 1
      %s292 = scalar_select %p291, %s20, 1
      %p293 = scmp.lt.s32.totalorder %s290, 31
      %s294 = scalar_select %p293, %s290, 31
      %s295 = smul.addr %s292, 32
      %s296 = sadd.s32 %s294, %s295
      %s297 = smul.addr %s296, 8
      %s298 = scalar_lea.vmem %s5, %s297
      %s299 = smul.u32 8, %s21
      %s300 = ssub.s32 18, %s299
      %p301 = scmp.lt.s32.totalorder %s300, 8
      %s302 = scalar_select %p301, %s300, 8
      %s303 = smul.u32 8, %s302
      %s304 = smul.u32 %s303, 3
      %p305 = scmp.lt.s32.totalorder %s20, 1
      %s306 = scalar_select %p305, %s20, 1
      %p307 = scmp.lt.s32.totalorder %s299, 17
      %s308 = scalar_select %p307, %s299, 17
      %s309 = smul.addr %s308, 3
      %s310 = smul.addr %s306, 54
      %s311 = sadd.s32 %s309, %s310
      %s312 = smul.addr %s311, 8
      %s313 = scalar_lea.vmem %s0, %s312
      %s314 = smul.u32 8, %s21
      %s315 = ssub.s32 18, %s314
      %p316 = scmp.lt.s32.totalorder %s315, 8
      %s317 = scalar_select %p316, %s315, 8
      %s318 = smul.u32 8, %s317
      %s319 = smul.u32 %s318, 3
      %s320 = sadd.s32 %s21, 1
      %s321 = smul.u32 %s320, 4
      %s322 = smul.u32 2, %s321
      %p323 = scmp.lt.s32.totalorder %s20, 1
      %s324 = scalar_select %p323, %s20, 1
      %p325 = scmp.lt.s32.totalorder %s322, 17
      %s326 = scalar_select %p325, %s322, 17
      %s327 = smul.addr %s326, 3
      %s328 = smul.addr %s324, 54
      %s329 = sadd.s32 %s327, %s328
      %s330 = smul.addr %s329, 8
      %s331 = scalar_lea.vmem %s1, %s330
      %s332 = sadd.s32 %s21, 1
      %s333 = smul.u32 %s332, 4
      %s334 = smul.u32 2, %s333
      %s335 = smul.u32 16, %s21
      %p336 = scmp.lt.s32.totalorder %s20, 1
      %s337 = scalar_select %p336, %s20, 1
      %p338 = scmp.lt.s32.totalorder %s335, 31
      %s339 = scalar_select %p338, %s335, 31
      %s340 = smul.addr %s337, 32
      %s341 = sadd.s32 %s339, %s340
      %s342 = smul.addr %s341, 8
      %s343 = scalar_lea.vmem %s5, %s342
      %s344 = smul.u32 16, %s21
      %v345 = vld [vmem:[%s313] sm:$0xff]
      %v346 = vld [vmem:[%s313 + $0x8] sm:$0xff]
      %v347 = vld [vmem:[%s313 + $0x10] sm:$0x3]
      %v348 = vld [vmem:[%s313 + $0x18] sm:$0xff]
      %v349 = vld [vmem:[%s313 + $0x20] sm:$0xff]
      %v350 = vld [vmem:[%s313 + $0x28] sm:$0x3]
      %v351 = vld [vmem:[%s313 + $0x30] sm:$0xff]
      %v352 = vld [vmem:[%s313 + $0x38] sm:$0xff]
      %v353 = vld [vmem:[%s313 + $0x40] sm:$0x3]
      %v354 = vld [vmem:[%s313 + $0x48] sm:$0xff]
      %v355 = vld [vmem:[%s313 + $0x50] sm:$0xff]
      %v356 = vld [vmem:[%s313 + $0x58] sm:$0x3]
      %v357 = vld [vmem:[%s313 + $0x60] sm:$0xff]
      %v358 = vld [vmem:[%s313 + $0x68] sm:$0xff]
      %v359 = vld [vmem:[%s313 + $0x70] sm:$0x3]
      %v360 = vld [vmem:[%s313 + $0x78] sm:$0xff]
      %v361 = vld [vmem:[%s313 + $0x80] sm:$0xff]
      %v362 = vld [vmem:[%s313 + $0x88] sm:$0x3]
      %v363 = vld [vmem:[%s313 + $0x90] sm:$0xff]
      %v364 = vld [vmem:[%s313 + $0x98] sm:$0xff]
      %v365 = vld [vmem:[%s313 + $0xa0] sm:$0x3]
      %v366 = vld [vmem:[%s313 + $0xa8] sm:$0xff]
      %v367 = vld [vmem:[%s313 + $0xb0] sm:$0xff]
      %v368 = vld [vmem:[%s313 + $0xb8] sm:$0x3]
      %vm369 = vcmask 31744
      %370 = vst.msk [vmem:[#allocation2] sm:$0xff] %vm369, %v345
      %371 = vst.msk [vmem:[#allocation2 + $0x8] sm:$0xff] %vm369, %v346
      %vm372 = vcmask 25600
      %373 = vst.msk [vmem:[#allocation2 + $0x10] sm:$0x3] %vm372, %v347
      %374 = vst.msk [vmem:[#allocation2 + $0x18] sm:$0xff] %vm369, %v348
      %375 = vst.msk [vmem:[#allocation2 + $0x20] sm:$0xff] %vm369, %v349
      %376 = vst.msk [vmem:[#allocation2 + $0x28] sm:$0x3] %vm372, %v350
      %377 = vst.msk [vmem:[#allocation2 + $0x30] sm:$0xff] %vm369, %v351
      %378 = vst.msk [vmem:[#allocation2 + $0x38] sm:$0xff] %vm369, %v352
      %379 = vst.msk [vmem:[#allocation2 + $0x40] sm:$0x3] %vm372, %v353
      %380 = vst.msk [vmem:[#allocation2 + $0x48] sm:$0xff] %vm369, %v354
      %381 = vst.msk [vmem:[#allocation2 + $0x50] sm:$0xff] %vm369, %v355
      %382 = vst.msk [vmem:[#allocation2 + $0x58] sm:$0x3] %vm372, %v356
      %383 = vst.msk [vmem:[#allocation2 + $0x60] sm:$0xff] %vm369, %v357
      %384 = vst.msk [vmem:[#allocation2 + $0x68] sm:$0xff] %vm369, %v358
      %385 = vst.msk [vmem:[#allocation2 + $0x70] sm:$0x3] %vm372, %v359
      %386 = vst.msk [vmem:[#allocation2 + $0x78] sm:$0xff] %vm369, %v360
      %387 = vst.msk [vmem:[#allocation2 + $0x80] sm:$0xff] %vm369, %v361
      %388 = vst.msk [vmem:[#allocation2 + $0x88] sm:$0x3] %vm372, %v362
      %389 = vst.msk [vmem:[#allocation2 + $0x90] sm:$0xff] %vm369, %v363
      %390 = vst.msk [vmem:[#allocation2 + $0x98] sm:$0xff] %vm369, %v364
      %391 = vst.msk [vmem:[#allocation2 + $0xa0] sm:$0x3] %vm372, %v365
      %392 = vst.msk [vmem:[#allocation2 + $0xa8] sm:$0xff] %vm369, %v366
      %393 = vst.msk [vmem:[#allocation2 + $0xb0] sm:$0xff] %vm369, %v367
      %394 = vst.msk [vmem:[#allocation2 + $0xb8] sm:$0x3] %vm372, %v368
      %v395 = vld [vmem:[%s331] sm:$0xff]
      %v396 = vld [vmem:[%s331 + $0x8] sm:$0xff]
      %v397 = vld [vmem:[%s331 + $0x10] sm:$0x3]
      %v398 = vld [vmem:[%s331 + $0x18] sm:$0xff]
      %v399 = vld [vmem:[%s331 + $0x20] sm:$0xff]
      %v400 = vld [vmem:[%s331 + $0x28] sm:$0x3]
      %s401 = scalar_lea.vmem [#allocation2], 192
      %402 = vst.msk [vmem:[%s401] sm:$0xff] %vm369, %v395
      %403 = vst.msk [vmem:[%s401 + $0x8] sm:$0xff] %vm369, %v396
      %404 = vst.msk [vmem:[%s401 + $0x10] sm:$0x3] %vm372, %v397
      %405 = vst.msk [vmem:[%s401 + $0x18] sm:$0xff] %vm369, %v398
      %406 = vst.msk [vmem:[%s401 + $0x20] sm:$0xff] %vm369, %v399
      %407 = vst.msk [vmem:[%s401 + $0x28] sm:$0x3] %vm372, %v400
      %v408 = vld [vmem:[#allocation2] sm:$0xff]
      %v409 = vld [vmem:[#allocation2 + $0x8] sm:$0xff]
      %v410 = vld [vmem:[#allocation2 + $0x18] sm:$0xff]
      %v411 = vld [vmem:[#allocation2 + $0x20] sm:$0xff]
      %v412 = vld [vmem:[#allocation2 + $0x30] sm:$0xff]
      %v413 = vld [vmem:[#allocation2 + $0x38] sm:$0xff]
      %v414 = vld [vmem:[#allocation2 + $0x48] sm:$0xff]
      %v415 = vld [vmem:[#allocation2 + $0x50] sm:$0xff]
      %v416 = vld [vmem:[#allocation2 + $0x60] sm:$0xff]
      %v417 = vld [vmem:[#allocation2 + $0x68] sm:$0xff]
      %v418 = vld [vmem:[#allocation2 + $0x78] sm:$0xff]
      %v419 = vld [vmem:[#allocation2 + $0x80] sm:$0xff]
      %v420 = vld [vmem:[#allocation2 + $0x90] sm:$0xff]
      %v421 = vld [vmem:[#allocation2 + $0x98] sm:$0xff]
      %v422 = vld [vmem:[#allocation2 + $0xa8] sm:$0xff]
      %v423 = vld [vmem:[#allocation2 + $0xb0] sm:$0xff]
      %v424 = vld [vmem:[#allocation2 + $0xc0] sm:$0xff]
      %v425 = vld [vmem:[#allocation2 + $0xc8] sm:$0xff]
      %v426 = vld [vmem:[#allocation2 + $0xd8] sm:$0xff]
      %v427 = vld [vmem:[#allocation2 + $0xe0] sm:$0xff]
      %v428 = vld [vmem:[%s2] sm:$0xf]
      %s429 = scalar_lea.vmem %s2, 12
      %v430 = vld [vmem:[%s429] sm:$0xf]
      %v432 = vsel %vm369, %v410, 0
      %v435 = vsel %vm369, %v411, 0
      %v438 = vsel %vm369, %v412, 0
      %v441 = vsel %vm369, %v413, 0
      %v444 = vsel %vm369, %v414, 0
      %v447 = vsel %vm369, %v415, 0
      %v450 = vsel %vm369, %v416, 0
      %v453 = vsel %vm369, %v417, 0
      %v456 = vsel %vm369, %v418, 0
      %v459 = vsel %vm369, %v419, 0
      %v462 = vsel %vm369, %v420, 0
      %v465 = vsel %vm369, %v421, 0
      %v468 = vsel %vm369, %v422, 0
      %v471 = vsel %vm369, %v423, 0
      %v474 = vsel %vm369, %v424, 0
      %v477 = vsel %vm369, %v425, 0
      %vm479 = vcmask 1043456
      %v481 = vsel %vm479, %v430, 0
      %483 = vmatpush.msra.mxu0 0.0
      %484 = vmatpush.msra.mxu0 0.0
      %485 = vmatpush.msra.mxu0 0.0
      %486 = vmatpush.msra.mxu0 0.0
      %487 = vmatpush.msra.mxu0 0.0
      %488 = vmatpush.msra.mxu0 0.0
      %489 = vmatpush.msra.mxu0 0.0
      %490 = vmatpush.msra.mxu0 0.0
      %491 = vmatpush.msra.mxu0 0.0
      %492 = vmatpush.msra.mxu0 0.0
      %493 = vmatpush.msra.mxu0 0.0
      %494 = vmatpush.msra.mxu0 0.0
      %495 = vmatpush.msra.mxu0 0.0
      %496 = vmatpush.msra.mxu0 0.0
      %497 = vmatpush.msra.mxu0 0.0
      %498 = vmatpush.msra.mxu0 %v481
      %499 = vmatmul.f32.gmra.mxu0 %v432
      %v500 = vpop.f32.mrf.mxu0
      %v501 = vadd.f32 0.0, %v500
      %502 = vmatmul.f32.gmra.mxu0 %v435
      %v503 = vpop.f32.mrf.mxu0
      %v504 = vadd.f32 0.0, %v503
      %505 = vmatmul.f32.gmra.mxu0 %v438
      %v506 = vpop.f32.mrf.mxu0
      %v507 = vadd.f32 0.0, %v506
      %508 = vmatmul.f32.gmra.mxu0 %v441
      %v509 = vpop.f32.mrf.mxu0
      %v510 = vadd.f32 0.0, %v509
      %511 = vmatmul.f32.gmra.mxu0 %v444
      %v512 = vpop.f32.mrf.mxu0
      %v513 = vadd.f32 0.0, %v512
      %514 = vmatmul.f32.gmra.mxu0 %v447
      %v515 = vpop.f32.mrf.mxu0
      %v516 = vadd.f32 0.0, %v515
      %517 = vmatmul.f32.gmra.mxu0 %v450
      %v518 = vpop.f32.mrf.mxu0
      %v519 = vadd.f32 0.0, %v518
      %520 = vmatmul.f32.gmra.mxu0 %v453
      %v521 = vpop.f32.mrf.mxu0
      %v522 = vadd.f32 0.0, %v521
      %523 = vmatmul.f32.gmra.mxu0 %v456
      %v524 = vpop.f32.mrf.mxu0
      %v525 = vadd.f32 0.0, %v524
      %526 = vmatmul.f32.gmra.mxu0 %v459
      %v527 = vpop.f32.mrf.mxu0
      %v528 = vadd.f32 0.0, %v527
      %529 = vmatmul.f32.gmra.mxu0 %v462
      %v530 = vpop.f32.mrf.mxu0
      %v531 = vadd.f32 0.0, %v530
      %532 = vmatmul.f32.gmra.mxu0 %v465
      %v533 = vpop.f32.mrf.mxu0
      %v534 = vadd.f32 0.0, %v533
      %535 = vmatmul.f32.gmra.mxu0 %v468
      %v536 = vpop.f32.mrf.mxu0
      %v537 = vadd.f32 0.0, %v536
      %538 = vmatmul.f32.gmra.mxu0 %v471
      %v539 = vpop.f32.mrf.mxu0
      %v540 = vadd.f32 0.0, %v539
      %541 = vmatmul.f32.gmra.mxu0 %v474
      %v542 = vpop.f32.mrf.mxu0
      %v543 = vadd.f32 0.0, %v542
      %544 = vmatmul.f32.gmra.mxu0 %v477
      %v545 = vpop.f32.mrf.mxu0
      %v546 = vadd.f32 0.0, %v545
      %547 = vdwg.mxu0
      %v549 = vsel %vm369, %v408, 0
      %v552 = vsel %vm369, %v409, 0
      %v555 = vsel %vm479, %v428, 0
      %557 = vmatpush.msra.mxu0 0.0
      %558 = vmatpush.msra.mxu0 0.0
      %559 = vmatpush.msra.mxu0 0.0
      %560 = vmatpush.msra.mxu0 0.0
      %561 = vmatpush.msra.mxu0 0.0
      %562 = vmatpush.msra.mxu0 0.0
      %563 = vmatpush.msra.mxu0 0.0
      %564 = vmatpush.msra.mxu0 0.0
      %565 = vmatpush.msra.mxu0 0.0
      %566 = vmatpush.msra.mxu0 0.0
      %567 = vmatpush.msra.mxu0 0.0
      %568 = vmatpush.msra.mxu0 0.0
      %569 = vmatpush.msra.mxu0 0.0
      %570 = vmatpush.msra.mxu0 0.0
      %571 = vmatpush.msra.mxu0 0.0
      %572 = vmatpush.msra.mxu0 %v555
      %573 = vmatmul.f32.gmra.mxu0 %v549
      %v574 = vpop.f32.mrf.mxu0
      %v575 = vadd.f32 %v501, %v574
      %576 = vmatmul.f32.gmra.mxu0 %v552
      %v577 = vpop.f32.mrf.mxu0
      %v578 = vadd.f32 %v504, %v577
      %579 = vmatmul.f32.gmra.mxu0 %v432
      %v580 = vpop.f32.mrf.mxu0
      %v581 = vadd.f32 %v507, %v580
      %582 = vmatmul.f32.gmra.mxu0 %v435
      %v583 = vpop.f32.mrf.mxu0
      %v584 = vadd.f32 %v510, %v583
      %585 = vmatmul.f32.gmra.mxu0 %v438
      %v586 = vpop.f32.mrf.mxu0
      %v587 = vadd.f32 %v513, %v586
      %588 = vmatmul.f32.gmra.mxu0 %v441
      %v589 = vpop.f32.mrf.mxu0
      %v590 = vadd.f32 %v516, %v589
      %591 = vmatmul.f32.gmra.mxu0 %v444
      %v592 = vpop.f32.mrf.mxu0
      %v593 = vadd.f32 %v519, %v592
      %594 = vmatmul.f32.gmra.mxu0 %v447
      %v595 = vpop.f32.mrf.mxu0
      %v596 = vadd.f32 %v522, %v595
      %597 = vmatmul.f32.gmra.mxu0 %v450
      %v598 = vpop.f32.mrf.mxu0
      %v599 = vadd.f32 %v525, %v598
      %600 = vmatmul.f32.gmra.mxu0 %v453
      %v601 = vpop.f32.mrf.mxu0
      %v602 = vadd.f32 %v528, %v601
      %603 = vmatmul.f32.gmra.mxu0 %v456
      %v604 = vpop.f32.mrf.mxu0
      %v605 = vadd.f32 %v531, %v604
      %606 = vmatmul.f32.gmra.mxu0 %v459
      %v607 = vpop.f32.mrf.mxu0
      %v608 = vadd.f32 %v534, %v607
      %609 = vmatmul.f32.gmra.mxu0 %v462
      %v610 = vpop.f32.mrf.mxu0
      %v611 = vadd.f32 %v537, %v610
      %612 = vmatmul.f32.gmra.mxu0 %v465
      %v613 = vpop.f32.mrf.mxu0
      %v614 = vadd.f32 %v540, %v613
      %615 = vmatmul.f32.gmra.mxu0 %v468
      %v616 = vpop.f32.mrf.mxu0
      %v617 = vadd.f32 %v543, %v616
      %618 = vmatmul.f32.gmra.mxu0 %v471
      %v619 = vpop.f32.mrf.mxu0
      %v620 = vadd.f32 %v546, %v619
      %621 = vdwg.mxu0
      %s622 = scalar_lea.vmem %s2, 24
      %v623 = vld [vmem:[%s622] sm:$0xf]
      %v625 = vsel %vm369, %v426, 0
      %v628 = vsel %vm369, %v427, 0
      %v631 = vsel %vm479, %v623, 0
      %633 = vmatpush.msra.mxu0 0.0
      %634 = vmatpush.msra.mxu0 0.0
      %635 = vmatpush.msra.mxu0 0.0
      %636 = vmatpush.msra.mxu0 0.0
      %637 = vmatpush.msra.mxu0 0.0
      %638 = vmatpush.msra.mxu0 0.0
      %639 = vmatpush.msra.mxu0 0.0
      %640 = vmatpush.msra.mxu0 0.0
      %641 = vmatpush.msra.mxu0 0.0
      %642 = vmatpush.msra.mxu0 0.0
      %643 = vmatpush.msra.mxu0 0.0
      %644 = vmatpush.msra.mxu0 0.0
      %645 = vmatpush.msra.mxu0 0.0
      %646 = vmatpush.msra.mxu0 0.0
      %647 = vmatpush.msra.mxu0 0.0
      %648 = vmatpush.msra.mxu0 %v631
      %649 = vmatmul.f32.gmra.mxu0 %v438
      %v650 = vpop.f32.mrf.mxu0
      %v651 = vadd.f32 0.0, %v650
      %652 = vmatmul.f32.gmra.mxu0 %v441
      %v653 = vpop.f32.mrf.mxu0
      %v654 = vadd.f32 0.0, %v653
      %655 = vmatmul.f32.gmra.mxu0 %v444
      %v656 = vpop.f32.mrf.mxu0
      %v657 = vadd.f32 0.0, %v656
      %658 = vmatmul.f32.gmra.mxu0 %v447
      %v659 = vpop.f32.mrf.mxu0
      %v660 = vadd.f32 0.0, %v659
      %661 = vmatmul.f32.gmra.mxu0 %v450
      %v662 = vpop.f32.mrf.mxu0
      %v663 = vadd.f32 0.0, %v662
      %664 = vmatmul.f32.gmra.mxu0 %v453
      %v665 = vpop.f32.mrf.mxu0
      %v666 = vadd.f32 0.0, %v665
      %667 = vmatmul.f32.gmra.mxu0 %v456
      %v668 = vpop.f32.mrf.mxu0
      %v669 = vadd.f32 0.0, %v668
      %670 = vmatmul.f32.gmra.mxu0 %v459
      %v671 = vpop.f32.mrf.mxu0
      %v672 = vadd.f32 0.0, %v671
      %673 = vmatmul.f32.gmra.mxu0 %v462
      %v674 = vpop.f32.mrf.mxu0
      %v675 = vadd.f32 0.0, %v674
      %676 = vmatmul.f32.gmra.mxu0 %v465
      %v677 = vpop.f32.mrf.mxu0
      %v678 = vadd.f32 0.0, %v677
      %679 = vmatmul.f32.gmra.mxu0 %v468
      %v680 = vpop.f32.mrf.mxu0
      %v681 = vadd.f32 0.0, %v680
      %682 = vmatmul.f32.gmra.mxu0 %v471
      %v683 = vpop.f32.mrf.mxu0
      %v684 = vadd.f32 0.0, %v683
      %685 = vmatmul.f32.gmra.mxu0 %v474
      %v686 = vpop.f32.mrf.mxu0
      %v687 = vadd.f32 0.0, %v686
      %688 = vmatmul.f32.gmra.mxu0 %v477
      %v689 = vpop.f32.mrf.mxu0
      %v690 = vadd.f32 0.0, %v689
      %691 = vmatmul.f32.gmra.mxu0 %v625
      %v692 = vpop.f32.mrf.mxu0
      %v693 = vadd.f32 0.0, %v692
      %694 = vmatmul.f32.gmra.mxu0 %v628
      %v695 = vpop.f32.mrf.mxu0
      %v696 = vadd.f32 0.0, %v695
      %697 = vdwg.mxu0
      %v698 = vadd.f32 %v575, %v651
      %v699 = vadd.f32 %v578, %v654
      %v700 = vadd.f32 %v581, %v657
      %v701 = vadd.f32 %v584, %v660
      %v702 = vadd.f32 %v587, %v663
      %v703 = vadd.f32 %v590, %v666
      %v704 = vadd.f32 %v593, %v669
      %v705 = vadd.f32 %v596, %v672
      %v706 = vadd.f32 %v599, %v675
      %v707 = vadd.f32 %v602, %v678
      %v708 = vadd.f32 %v605, %v681
      %v709 = vadd.f32 %v608, %v684
      %v710 = vadd.f32 %v611, %v687
      %v711 = vadd.f32 %v614, %v690
      %v712 = vadd.f32 %v617, %v693
      %v713 = vadd.f32 %v620, %v696
      %v714 = vld [vmem:[#allocation2 + $0x1] sm:$0xff]
      %v715 = vld [vmem:[#allocation2 + $0x9] sm:$0xff]
      %v716 = vld [vmem:[#allocation2 + $0x19] sm:$0xff]
      %v717 = vld [vmem:[#allocation2 + $0x21] sm:$0xff]
      %v718 = vld [vmem:[#allocation2 + $0x31] sm:$0xff]
      %v719 = vld [vmem:[#allocation2 + $0x39] sm:$0xff]
      %v720 = vld [vmem:[#allocation2 + $0x49] sm:$0xff]
      %v721 = vld [vmem:[#allocation2 + $0x51] sm:$0xff]
      %v722 = vld [vmem:[#allocation2 + $0x61] sm:$0xff]
      %v723 = vld [vmem:[#allocation2 + $0x69] sm:$0xff]
      %v724 = vld [vmem:[#allocation2 + $0x79] sm:$0xff]
      %v725 = vld [vmem:[#allocation2 + $0x81] sm:$0xff]
      %v726 = vld [vmem:[#allocation2 + $0x91] sm:$0xff]
      %v727 = vld [vmem:[#allocation2 + $0x99] sm:$0xff]
      %v728 = vld [vmem:[#allocation2 + $0xa9] sm:$0xff]
      %v729 = vld [vmem:[#allocation2 + $0xb1] sm:$0xff]
      %v730 = vld [vmem:[#allocation2 + $0xc1] sm:$0xff]
      %v731 = vld [vmem:[#allocation2 + $0xc9] sm:$0xff]
      %v732 = vld [vmem:[#allocation2 + $0xd9] sm:$0xff]
      %v733 = vld [vmem:[#allocation2 + $0xe1] sm:$0xff]
      %s734 = scalar_lea.vmem %s2, 4
      %v735 = vld [vmem:[%s734] sm:$0xf]
      %v737 = vsel %vm369, %v714, 0
      %v740 = vsel %vm369, %v715, 0
      %v743 = vsel %vm369, %v716, 0
      %v746 = vsel %vm369, %v717, 0
      %v749 = vsel %vm369, %v718, 0
      %v752 = vsel %vm369, %v719, 0
      %v755 = vsel %vm369, %v720, 0
      %v758 = vsel %vm369, %v721, 0
      %v761 = vsel %vm369, %v722, 0
      %v764 = vsel %vm369, %v723, 0
      %v767 = vsel %vm369, %v724, 0
      %v770 = vsel %vm369, %v725, 0
      %v773 = vsel %vm369, %v726, 0
      %v776 = vsel %vm369, %v727, 0
      %v779 = vsel %vm369, %v728, 0
      %v782 = vsel %vm369, %v729, 0
      %v785 = vsel %vm479, %v735, 0
      %787 = vmatpush.msra.mxu0 0.0
      %788 = vmatpush.msra.mxu0 0.0
      %789 = vmatpush.msra.mxu0 0.0
      %790 = vmatpush.msra.mxu0 0.0
      %791 = vmatpush.msra.mxu0 0.0
      %792 = vmatpush.msra.mxu0 0.0
      %793 = vmatpush.msra.mxu0 0.0
      %794 = vmatpush.msra.mxu0 0.0
      %795 = vmatpush.msra.mxu0 0.0
      %796 = vmatpush.msra.mxu0 0.0
      %797 = vmatpush.msra.mxu0 0.0
      %798 = vmatpush.msra.mxu0 0.0
      %799 = vmatpush.msra.mxu0 0.0
      %800 = vmatpush.msra.mxu0 0.0
      %801 = vmatpush.msra.mxu0 0.0
      %802 = vmatpush.msra.mxu0 %v785
      %803 = vmatmul.f32.gmra.mxu0 %v737
      %v804 = vpop.f32.mrf.mxu0
      %v805 = vadd.f32 0.0, %v804
      %806 = vmatmul.f32.gmra.mxu0 %v740
      %v807 = vpop.f32.mrf.mxu0
      %v808 = vadd.f32 0.0, %v807
      %809 = vmatmul.f32.gmra.mxu0 %v743
      %v810 = vpop.f32.mrf.mxu0
      %v811 = vadd.f32 0.0, %v810
      %812 = vmatmul.f32.gmra.mxu0 %v746
      %v813 = vpop.f32.mrf.mxu0
      %v814 = vadd.f32 0.0, %v813
      %815 = vmatmul.f32.gmra.mxu0 %v749
      %v816 = vpop.f32.mrf.mxu0
      %v817 = vadd.f32 0.0, %v816
      %818 = vmatmul.f32.gmra.mxu0 %v752
      %v819 = vpop.f32.mrf.mxu0
      %v820 = vadd.f32 0.0, %v819
      %821 = vmatmul.f32.gmra.mxu0 %v755
      %v822 = vpop.f32.mrf.mxu0
      %v823 = vadd.f32 0.0, %v822
      %824 = vmatmul.f32.gmra.mxu0 %v758
      %v825 = vpop.f32.mrf.mxu0
      %v826 = vadd.f32 0.0, %v825
      %827 = vmatmul.f32.gmra.mxu0 %v761
      %v828 = vpop.f32.mrf.mxu0
      %v829 = vadd.f32 0.0, %v828
      %830 = vmatmul.f32.gmra.mxu0 %v764
      %v831 = vpop.f32.mrf.mxu0
      %v832 = vadd.f32 0.0, %v831
      %833 = vmatmul.f32.gmra.mxu0 %v767
      %v834 = vpop.f32.mrf.mxu0
      %v835 = vadd.f32 0.0, %v834
      %836 = vmatmul.f32.gmra.mxu0 %v770
      %v837 = vpop.f32.mrf.mxu0
      %v838 = vadd.f32 0.0, %v837
      %839 = vmatmul.f32.gmra.mxu0 %v773
      %v840 = vpop.f32.mrf.mxu0
      %v841 = vadd.f32 0.0, %v840
      %842 = vmatmul.f32.gmra.mxu0 %v776
      %v843 = vpop.f32.mrf.mxu0
      %v844 = vadd.f32 0.0, %v843
      %845 = vmatmul.f32.gmra.mxu0 %v779
      %v846 = vpop.f32.mrf.mxu0
      %v847 = vadd.f32 0.0, %v846
      %848 = vmatmul.f32.gmra.mxu0 %v782
      %v849 = vpop.f32.mrf.mxu0
      %v850 = vadd.f32 0.0, %v849
      %851 = vdwg.mxu0
      %v852 = vadd.f32 %v698, %v805
      %v853 = vadd.f32 %v699, %v808
      %v854 = vadd.f32 %v700, %v811
      %v855 = vadd.f32 %v701, %v814
      %v856 = vadd.f32 %v702, %v817
      %v857 = vadd.f32 %v703, %v820
      %v858 = vadd.f32 %v704, %v823
      %v859 = vadd.f32 %v705, %v826
      %v860 = vadd.f32 %v706, %v829
      %v861 = vadd.f32 %v707, %v832
      %v862 = vadd.f32 %v708, %v835
      %v863 = vadd.f32 %v709, %v838
      %v864 = vadd.f32 %v710, %v841
      %v865 = vadd.f32 %v711, %v844
      %v866 = vadd.f32 %v712, %v847
      %v867 = vadd.f32 %v713, %v850
      %s868 = scalar_lea.vmem %s2, 16
      %v869 = vld [vmem:[%s868] sm:$0xf]
      %v871 = vsel %vm369, %v730, 0
      %v874 = vsel %vm369, %v731, 0
      %v877 = vsel %vm479, %v869, 0
      %879 = vmatpush.msra.mxu0 0.0
      %880 = vmatpush.msra.mxu0 0.0
      %881 = vmatpush.msra.mxu0 0.0
      %882 = vmatpush.msra.mxu0 0.0
      %883 = vmatpush.msra.mxu0 0.0
      %884 = vmatpush.msra.mxu0 0.0
      %885 = vmatpush.msra.mxu0 0.0
      %886 = vmatpush.msra.mxu0 0.0
      %887 = vmatpush.msra.mxu0 0.0
      %888 = vmatpush.msra.mxu0 0.0
      %889 = vmatpush.msra.mxu0 0.0
      %890 = vmatpush.msra.mxu0 0.0
      %891 = vmatpush.msra.mxu0 0.0
      %892 = vmatpush.msra.mxu0 0.0
      %893 = vmatpush.msra.mxu0 0.0
      %894 = vmatpush.msra.mxu0 %v877
      %895 = vmatmul.f32.gmra.mxu0 %v743
      %v896 = vpop.f32.mrf.mxu0
      %v897 = vadd.f32 0.0, %v896
      %898 = vmatmul.f32.gmra.mxu0 %v746
      %v899 = vpop.f32.mrf.mxu0
      %v900 = vadd.f32 0.0, %v899
      %901 = vmatmul.f32.gmra.mxu0 %v749
      %v902 = vpop.f32.mrf.mxu0
      %v903 = vadd.f32 0.0, %v902
      %904 = vmatmul.f32.gmra.mxu0 %v752
      %v905 = vpop.f32.mrf.mxu0
      %v906 = vadd.f32 0.0, %v905
      %907 = vmatmul.f32.gmra.mxu0 %v755
      %v908 = vpop.f32.mrf.mxu0
      %v909 = vadd.f32 0.0, %v908
      %910 = vmatmul.f32.gmra.mxu0 %v758
      %v911 = vpop.f32.mrf.mxu0
      %v912 = vadd.f32 0.0, %v911
      %913 = vmatmul.f32.gmra.mxu0 %v761
      %v914 = vpop.f32.mrf.mxu0
      %v915 = vadd.f32 0.0, %v914
      %916 = vmatmul.f32.gmra.mxu0 %v764
      %v917 = vpop.f32.mrf.mxu0
      %v918 = vadd.f32 0.0, %v917
      %919 = vmatmul.f32.gmra.mxu0 %v767
      %v920 = vpop.f32.mrf.mxu0
      %v921 = vadd.f32 0.0, %v920
      %922 = vmatmul.f32.gmra.mxu0 %v770
      %v923 = vpop.f32.mrf.mxu0
      %v924 = vadd.f32 0.0, %v923
      %925 = vmatmul.f32.gmra.mxu0 %v773
      %v926 = vpop.f32.mrf.mxu0
      %v927 = vadd.f32 0.0, %v926
      %928 = vmatmul.f32.gmra.mxu0 %v776
      %v929 = vpop.f32.mrf.mxu0
      %v930 = vadd.f32 0.0, %v929
      %931 = vmatmul.f32.gmra.mxu0 %v779
      %v932 = vpop.f32.mrf.mxu0
      %v933 = vadd.f32 0.0, %v932
      %934 = vmatmul.f32.gmra.mxu0 %v782
      %v935 = vpop.f32.mrf.mxu0
      %v936 = vadd.f32 0.0, %v935
      %937 = vmatmul.f32.gmra.mxu0 %v871
      %v938 = vpop.f32.mrf.mxu0
      %v939 = vadd.f32 0.0, %v938
      %940 = vmatmul.f32.gmra.mxu0 %v874
      %v941 = vpop.f32.mrf.mxu0
      %v942 = vadd.f32 0.0, %v941
      %943 = vdwg.mxu0
      %v944 = vadd.f32 %v852, %v897
      %v945 = vadd.f32 %v853, %v900
      %v946 = vadd.f32 %v854, %v903
      %v947 = vadd.f32 %v855, %v906
      %v948 = vadd.f32 %v856, %v909
      %v949 = vadd.f32 %v857, %v912
      %v950 = vadd.f32 %v858, %v915
      %v951 = vadd.f32 %v859, %v918
      %v952 = vadd.f32 %v860, %v921
      %v953 = vadd.f32 %v861, %v924
      %v954 = vadd.f32 %v862, %v927
      %v955 = vadd.f32 %v863, %v930
      %v956 = vadd.f32 %v864, %v933
      %v957 = vadd.f32 %v865, %v936
      %v958 = vadd.f32 %v866, %v939
      %v959 = vadd.f32 %v867, %v942
      %s960 = scalar_lea.vmem %s2, 28
      %v961 = vld [vmem:[%s960] sm:$0xf]
      %v963 = vsel %vm369, %v732, 0
      %v966 = vsel %vm369, %v733, 0
      %v969 = vsel %vm479, %v961, 0
      %971 = vmatpush.msra.mxu0 0.0
      %972 = vmatpush.msra.mxu0 0.0
      %973 = vmatpush.msra.mxu0 0.0
      %974 = vmatpush.msra.mxu0 0.0
      %975 = vmatpush.msra.mxu0 0.0
      %976 = vmatpush.msra.mxu0 0.0
      %977 = vmatpush.msra.mxu0 0.0
      %978 = vmatpush.msra.mxu0 0.0
      %979 = vmatpush.msra.mxu0 0.0
      %980 = vmatpush.msra.mxu0 0.0
      %981 = vmatpush.msra.mxu0 0.0
      %982 = vmatpush.msra.mxu0 0.0
      %983 = vmatpush.msra.mxu0 0.0
      %984 = vmatpush.msra.mxu0 0.0
      %985 = vmatpush.msra.mxu0 0.0
      %986 = vmatpush.msra.mxu0 %v969
      %987 = vmatmul.f32.gmra.mxu0 %v749
      %v988 = vpop.f32.mrf.mxu0
      %v989 = vadd.f32 0.0, %v988
      %990 = vmatmul.f32.gmra.mxu0 %v752
      %v991 = vpop.f32.mrf.mxu0
      %v992 = vadd.f32 0.0, %v991
      %993 = vmatmul.f32.gmra.mxu0 %v755
      %v994 = vpop.f32.mrf.mxu0
      %v995 = vadd.f32 0.0, %v994
      %996 = vmatmul.f32.gmra.mxu0 %v758
      %v997 = vpop.f32.mrf.mxu0
      %v998 = vadd.f32 0.0, %v997
      %999 = vmatmul.f32.gmra.mxu0 %v761
      %v1000 = vpop.f32.mrf.mxu0
      %v1001 = vadd.f32 0.0, %v1000
      %1002 = vmatmul.f32.gmra.mxu0 %v764
      %v1003 = vpop.f32.mrf.mxu0
      %v1004 = vadd.f32 0.0, %v1003
      %1005 = vmatmul.f32.gmra.mxu0 %v767
      %v1006 = vpop.f32.mrf.mxu0
      %v1007 = vadd.f32 0.0, %v1006
      %1008 = vmatmul.f32.gmra.mxu0 %v770
      %v1009 = vpop.f32.mrf.mxu0
      %v1010 = vadd.f32 0.0, %v1009
      %1011 = vmatmul.f32.gmra.mxu0 %v773
      %v1012 = vpop.f32.mrf.mxu0
      %v1013 = vadd.f32 0.0, %v1012
      %1014 = vmatmul.f32.gmra.mxu0 %v776
      %v1015 = vpop.f32.mrf.mxu0
      %v1016 = vadd.f32 0.0, %v1015
      %1017 = vmatmul.f32.gmra.mxu0 %v779
      %v1018 = vpop.f32.mrf.mxu0
      %v1019 = vadd.f32 0.0, %v1018
      %1020 = vmatmul.f32.gmra.mxu0 %v782
      %v1021 = vpop.f32.mrf.mxu0
      %v1022 = vadd.f32 0.0, %v1021
      %1023 = vmatmul.f32.gmra.mxu0 %v871
      %v1024 = vpop.f32.mrf.mxu0
      %v1025 = vadd.f32 0.0, %v1024
      %1026 = vmatmul.f32.gmra.mxu0 %v874
      %v1027 = vpop.f32.mrf.mxu0
      %v1028 = vadd.f32 0.0, %v1027
      %1029 = vmatmul.f32.gmra.mxu0 %v963
      %v1030 = vpop.f32.mrf.mxu0
      %v1031 = vadd.f32 0.0, %v1030
      %1032 = vmatmul.f32.gmra.mxu0 %v966
      %v1033 = vpop.f32.mrf.mxu0
      %v1034 = vadd.f32 0.0, %v1033
      %1035 = vdwg.mxu0
      %v1036 = vadd.f32 %v944, %v989
      %v1037 = vadd.f32 %v945, %v992
      %v1038 = vadd.f32 %v946, %v995
      %v1039 = vadd.f32 %v947, %v998
      %v1040 = vadd.f32 %v948, %v1001
      %v1041 = vadd.f32 %v949, %v1004
      %v1042 = vadd.f32 %v950, %v1007
      %v1043 = vadd.f32 %v951, %v1010
      %v1044 = vadd.f32 %v952, %v1013
      %v1045 = vadd.f32 %v953, %v1016
      %v1046 = vadd.f32 %v954, %v1019
      %v1047 = vadd.f32 %v955, %v1022
      %v1048 = vadd.f32 %v956, %v1025
      %v1049 = vadd.f32 %v957, %v1028
      %v1050 = vadd.f32 %v958, %v1031
      %v1051 = vadd.f32 %v959, %v1034
      %v1052 = vld [vmem:[#allocation2 + $0x2] sm:$0xff]
      %v1053 = vld [vmem:[#allocation2 + $0xa] sm:$0xff]
      %v1054 = vld [vmem:[#allocation2 + $0x1a] sm:$0xff]
      %v1055 = vld [vmem:[#allocation2 + $0x22] sm:$0xff]
      %v1056 = vld [vmem:[#allocation2 + $0x32] sm:$0xff]
      %v1057 = vld [vmem:[#allocation2 + $0x3a] sm:$0xff]
      %v1058 = vld [vmem:[#allocation2 + $0x4a] sm:$0xff]
      %v1059 = vld [vmem:[#allocation2 + $0x52] sm:$0xff]
      %v1060 = vld [vmem:[#allocation2 + $0x62] sm:$0xff]
      %v1061 = vld [vmem:[#allocation2 + $0x6a] sm:$0xff]
      %v1062 = vld [vmem:[#allocation2 + $0x7a] sm:$0xff]
      %v1063 = vld [vmem:[#allocation2 + $0x82] sm:$0xff]
      %v1064 = vld [vmem:[#allocation2 + $0x92] sm:$0xff]
      %v1065 = vld [vmem:[#allocation2 + $0x9a] sm:$0xff]
      %v1066 = vld [vmem:[#allocation2 + $0xaa] sm:$0xff]
      %v1067 = vld [vmem:[#allocation2 + $0xb2] sm:$0xff]
      %v1068 = vld [vmem:[#allocation2 + $0xc2] sm:$0xff]
      %v1069 = vld [vmem:[#allocation2 + $0xca] sm:$0xff]
      %v1070 = vld [vmem:[#allocation2 + $0xda] sm:$0xff]
      %v1071 = vld [vmem:[#allocation2 + $0xe2] sm:$0xff]
      %s1072 = scalar_lea.vmem %s2, 8
      %v1073 = vld [vmem:[%s1072] sm:$0xf]
      %v1075 = vsel %vm369, %v1052, 0
      %v1078 = vsel %vm369, %v1053, 0
      %v1081 = vsel %vm369, %v1054, 0
      %v1084 = vsel %vm369, %v1055, 0
      %v1087 = vsel %vm369, %v1056, 0
      %v1090 = vsel %vm369, %v1057, 0
      %v1093 = vsel %vm369, %v1058, 0
      %v1096 = vsel %vm369, %v1059, 0
      %v1099 = vsel %vm369, %v1060, 0
      %v1102 = vsel %vm369, %v1061, 0
      %v1105 = vsel %vm369, %v1062, 0
      %v1108 = vsel %vm369, %v1063, 0
      %v1111 = vsel %vm369, %v1064, 0
      %v1114 = vsel %vm369, %v1065, 0
      %v1117 = vsel %vm369, %v1066, 0
      %v1120 = vsel %vm369, %v1067, 0
      %v1123 = vsel %vm479, %v1073, 0
      %1125 = vmatpush.msra.mxu0 0.0
      %1126 = vmatpush.msra.mxu0 0.0
      %1127 = vmatpush.msra.mxu0 0.0
      %1128 = vmatpush.msra.mxu0 0.0
      %1129 = vmatpush.msra.mxu0 0.0
      %1130 = vmatpush.msra.mxu0 0.0
      %1131 = vmatpush.msra.mxu0 0.0
      %1132 = vmatpush.msra.mxu0 0.0
      %1133 = vmatpush.msra.mxu0 0.0
      %1134 = vmatpush.msra.mxu0 0.0
      %1135 = vmatpush.msra.mxu0 0.0
      %1136 = vmatpush.msra.mxu0 0.0
      %1137 = vmatpush.msra.mxu0 0.0
      %1138 = vmatpush.msra.mxu0 0.0
      %1139 = vmatpush.msra.mxu0 0.0
      %1140 = vmatpush.msra.mxu0 %v1123
      %1141 = vmatmul.f32.gmra.mxu0 %v1075
      %v1142 = vpop.f32.mrf.mxu0
      %v1143 = vadd.f32 0.0, %v1142
      %1144 = vmatmul.f32.gmra.mxu0 %v1078
      %v1145 = vpop.f32.mrf.mxu0
      %v1146 = vadd.f32 0.0, %v1145
      %1147 = vmatmul.f32.gmra.mxu0 %v1081
      %v1148 = vpop.f32.mrf.mxu0
      %v1149 = vadd.f32 0.0, %v1148
      %1150 = vmatmul.f32.gmra.mxu0 %v1084
      %v1151 = vpop.f32.mrf.mxu0
      %v1152 = vadd.f32 0.0, %v1151
      %1153 = vmatmul.f32.gmra.mxu0 %v1087
      %v1154 = vpop.f32.mrf.mxu0
      %v1155 = vadd.f32 0.0, %v1154
      %1156 = vmatmul.f32.gmra.mxu0 %v1090
      %v1157 = vpop.f32.mrf.mxu0
      %v1158 = vadd.f32 0.0, %v1157
      %1159 = vmatmul.f32.gmra.mxu0 %v1093
      %v1160 = vpop.f32.mrf.mxu0
      %v1161 = vadd.f32 0.0, %v1160
      %1162 = vmatmul.f32.gmra.mxu0 %v1096
      %v1163 = vpop.f32.mrf.mxu0
      %v1164 = vadd.f32 0.0, %v1163
      %1165 = vmatmul.f32.gmra.mxu0 %v1099
      %v1166 = vpop.f32.mrf.mxu0
      %v1167 = vadd.f32 0.0, %v1166
      %1168 = vmatmul.f32.gmra.mxu0 %v1102
      %v1169 = vpop.f32.mrf.mxu0
      %v1170 = vadd.f32 0.0, %v1169
      %1171 = vmatmul.f32.gmra.mxu0 %v1105
      %v1172 = vpop.f32.mrf.mxu0
      %v1173 = vadd.f32 0.0, %v1172
      %1174 = vmatmul.f32.gmra.mxu0 %v1108
      %v1175 = vpop.f32.mrf.mxu0
      %v1176 = vadd.f32 0.0, %v1175
      %1177 = vmatmul.f32.gmra.mxu0 %v1111
      %v1178 = vpop.f32.mrf.mxu0
      %v1179 = vadd.f32 0.0, %v1178
      %1180 = vmatmul.f32.gmra.mxu0 %v1114
      %v1181 = vpop.f32.mrf.mxu0
      %v1182 = vadd.f32 0.0, %v1181
      %1183 = vmatmul.f32.gmra.mxu0 %v1117
      %v1184 = vpop.f32.mrf.mxu0
      %v1185 = vadd.f32 0.0, %v1184
      %1186 = vmatmul.f32.gmra.mxu0 %v1120
      %v1187 = vpop.f32.mrf.mxu0
      %v1188 = vadd.f32 0.0, %v1187
      %1189 = vdwg.mxu0
      %v1190 = vadd.f32 %v1036, %v1143
      %v1191 = vadd.f32 %v1037, %v1146
      %v1192 = vadd.f32 %v1038, %v1149
      %v1193 = vadd.f32 %v1039, %v1152
      %v1194 = vadd.f32 %v1040, %v1155
      %v1195 = vadd.f32 %v1041, %v1158
      %v1196 = vadd.f32 %v1042, %v1161
      %v1197 = vadd.f32 %v1043, %v1164
      %v1198 = vadd.f32 %v1044, %v1167
      %v1199 = vadd.f32 %v1045, %v1170
      %v1200 = vadd.f32 %v1046, %v1173
      %v1201 = vadd.f32 %v1047, %v1176
      %v1202 = vadd.f32 %v1048, %v1179
      %v1203 = vadd.f32 %v1049, %v1182
      %v1204 = vadd.f32 %v1050, %v1185
      %v1205 = vadd.f32 %v1051, %v1188
      %s1206 = scalar_lea.vmem %s2, 20
      %v1207 = vld [vmem:[%s1206] sm:$0xf]
      %v1209 = vsel %vm369, %v1068, 0
      %v1212 = vsel %vm369, %v1069, 0
      %v1215 = vsel %vm479, %v1207, 0
      %1217 = vmatpush.msra.mxu0 0.0
      %1218 = vmatpush.msra.mxu0 0.0
      %1219 = vmatpush.msra.mxu0 0.0
      %1220 = vmatpush.msra.mxu0 0.0
      %1221 = vmatpush.msra.mxu0 0.0
      %1222 = vmatpush.msra.mxu0 0.0
      %1223 = vmatpush.msra.mxu0 0.0
      %1224 = vmatpush.msra.mxu0 0.0
      %1225 = vmatpush.msra.mxu0 0.0
      %1226 = vmatpush.msra.mxu0 0.0
      %1227 = vmatpush.msra.mxu0 0.0
      %1228 = vmatpush.msra.mxu0 0.0
      %1229 = vmatpush.msra.mxu0 0.0
      %1230 = vmatpush.msra.mxu0 0.0
      %1231 = vmatpush.msra.mxu0 0.0
      %1232 = vmatpush.msra.mxu0 %v1215
      %1233 = vmatmul.f32.gmra.mxu0 %v1081
      %v1234 = vpop.f32.mrf.mxu0
      %v1235 = vadd.f32 0.0, %v1234
      %1236 = vmatmul.f32.gmra.mxu0 %v1084
      %v1237 = vpop.f32.mrf.mxu0
      %v1238 = vadd.f32 0.0, %v1237
      %1239 = vmatmul.f32.gmra.mxu0 %v1087
      %v1240 = vpop.f32.mrf.mxu0
      %v1241 = vadd.f32 0.0, %v1240
      %1242 = vmatmul.f32.gmra.mxu0 %v1090
      %v1243 = vpop.f32.mrf.mxu0
      %v1244 = vadd.f32 0.0, %v1243
      %1245 = vmatmul.f32.gmra.mxu0 %v1093
      %v1246 = vpop.f32.mrf.mxu0
      %v1247 = vadd.f32 0.0, %v1246
      %1248 = vmatmul.f32.gmra.mxu0 %v1096
      %v1249 = vpop.f32.mrf.mxu0
      %v1250 = vadd.f32 0.0, %v1249
      %1251 = vmatmul.f32.gmra.mxu0 %v1099
      %v1252 = vpop.f32.mrf.mxu0
      %v1253 = vadd.f32 0.0, %v1252
      %1254 = vmatmul.f32.gmra.mxu0 %v1102
      %v1255 = vpop.f32.mrf.mxu0
      %v1256 = vadd.f32 0.0, %v1255
      %1257 = vmatmul.f32.gmra.mxu0 %v1105
      %v1258 = vpop.f32.mrf.mxu0
      %v1259 = vadd.f32 0.0, %v1258
      %1260 = vmatmul.f32.gmra.mxu0 %v1108
      %v1261 = vpop.f32.mrf.mxu0
      %v1262 = vadd.f32 0.0, %v1261
      %1263 = vmatmul.f32.gmra.mxu0 %v1111
      %v1264 = vpop.f32.mrf.mxu0
      %v1265 = vadd.f32 0.0, %v1264
      %1266 = vmatmul.f32.gmra.mxu0 %v1114
      %v1267 = vpop.f32.mrf.mxu0
      %v1268 = vadd.f32 0.0, %v1267
      %1269 = vmatmul.f32.gmra.mxu0 %v1117
      %v1270 = vpop.f32.mrf.mxu0
      %v1271 = vadd.f32 0.0, %v1270
      %1272 = vmatmul.f32.gmra.mxu0 %v1120
      %v1273 = vpop.f32.mrf.mxu0
      %v1274 = vadd.f32 0.0, %v1273
      %1275 = vmatmul.f32.gmra.mxu0 %v1209
      %v1276 = vpop.f32.mrf.mxu0
      %v1277 = vadd.f32 0.0, %v1276
      %1278 = vmatmul.f32.gmra.mxu0 %v1212
      %v1279 = vpop.f32.mrf.mxu0
      %v1280 = vadd.f32 0.0, %v1279
      %1281 = vdwg.mxu0
      %v1282 = vadd.f32 %v1190, %v1235
      %v1283 = vadd.f32 %v1191, %v1238
      %v1284 = vadd.f32 %v1192, %v1241
      %v1285 = vadd.f32 %v1193, %v1244
      %v1286 = vadd.f32 %v1194, %v1247
      %v1287 = vadd.f32 %v1195, %v1250
      %v1288 = vadd.f32 %v1196, %v1253
      %v1289 = vadd.f32 %v1197, %v1256
      %v1290 = vadd.f32 %v1198, %v1259
      %v1291 = vadd.f32 %v1199, %v1262
      %v1292 = vadd.f32 %v1200, %v1265
      %v1293 = vadd.f32 %v1201, %v1268
      %v1294 = vadd.f32 %v1202, %v1271
      %v1295 = vadd.f32 %v1203, %v1274
      %v1296 = vadd.f32 %v1204, %v1277
      %v1297 = vadd.f32 %v1205, %v1280
      %s1298 = scalar_lea.vmem %s2, 32
      %v1299 = vld [vmem:[%s1298] sm:$0xf]
      %v1301 = vsel %vm369, %v1070, 0
      %v1304 = vsel %vm369, %v1071, 0
      %v1307 = vsel %vm479, %v1299, 0
      %1309 = vmatpush.msra.mxu0 0.0
      %1310 = vmatpush.msra.mxu0 0.0
      %1311 = vmatpush.msra.mxu0 0.0
      %1312 = vmatpush.msra.mxu0 0.0
      %1313 = vmatpush.msra.mxu0 0.0
      %1314 = vmatpush.msra.mxu0 0.0
      %1315 = vmatpush.msra.mxu0 0.0
      %1316 = vmatpush.msra.mxu0 0.0
      %1317 = vmatpush.msra.mxu0 0.0
      %1318 = vmatpush.msra.mxu0 0.0
      %1319 = vmatpush.msra.mxu0 0.0
      %1320 = vmatpush.msra.mxu0 0.0
      %1321 = vmatpush.msra.mxu0 0.0
      %1322 = vmatpush.msra.mxu0 0.0
      %1323 = vmatpush.msra.mxu0 0.0
      %1324 = vmatpush.msra.mxu0 %v1307
      %1325 = vmatmul.f32.gmra.mxu0 %v1087
      %v1326 = vpop.f32.mrf.mxu0
      %v1327 = vadd.f32 0.0, %v1326
      %1328 = vmatmul.f32.gmra.mxu0 %v1090
      %v1329 = vpop.f32.mrf.mxu0
      %v1330 = vadd.f32 0.0, %v1329
      %1331 = vmatmul.f32.gmra.mxu0 %v1093
      %v1332 = vpop.f32.mrf.mxu0
      %v1333 = vadd.f32 0.0, %v1332
      %1334 = vmatmul.f32.gmra.mxu0 %v1096
      %v1335 = vpop.f32.mrf.mxu0
      %v1336 = vadd.f32 0.0, %v1335
      %1337 = vmatmul.f32.gmra.mxu0 %v1099
      %v1338 = vpop.f32.mrf.mxu0
      %v1339 = vadd.f32 0.0, %v1338
      %1340 = vmatmul.f32.gmra.mxu0 %v1102
      %v1341 = vpop.f32.mrf.mxu0
      %v1342 = vadd.f32 0.0, %v1341
      %1343 = vmatmul.f32.gmra.mxu0 %v1105
      %v1344 = vpop.f32.mrf.mxu0
      %v1345 = vadd.f32 0.0, %v1344
      %1346 = vmatmul.f32.gmra.mxu0 %v1108
      %v1347 = vpop.f32.mrf.mxu0
      %v1348 = vadd.f32 0.0, %v1347
      %1349 = vmatmul.f32.gmra.mxu0 %v1111
      %v1350 = vpop.f32.mrf.mxu0
      %v1351 = vadd.f32 0.0, %v1350
      %1352 = vmatmul.f32.gmra.mxu0 %v1114
      %v1353 = vpop.f32.mrf.mxu0
      %v1354 = vadd.f32 0.0, %v1353
      %1355 = vmatmul.f32.gmra.mxu0 %v1117
      %v1356 = vpop.f32.mrf.mxu0
      %v1357 = vadd.f32 0.0, %v1356
      %1358 = vmatmul.f32.gmra.mxu0 %v1120
      %v1359 = vpop.f32.mrf.mxu0
      %v1360 = vadd.f32 0.0, %v1359
      %1361 = vmatmul.f32.gmra.mxu0 %v1209
      %v1362 = vpop.f32.mrf.mxu0
      %v1363 = vadd.f32 0.0, %v1362
      %1364 = vmatmul.f32.gmra.mxu0 %v1212
      %v1365 = vpop.f32.mrf.mxu0
      %v1366 = vadd.f32 0.0, %v1365
      %1367 = vmatmul.f32.gmra.mxu0 %v1301
      %v1368 = vpop.f32.mrf.mxu0
      %v1369 = vadd.f32 0.0, %v1368
      %1370 = vmatmul.f32.gmra.mxu0 %v1304
      %v1371 = vpop.f32.mrf.mxu0
      %v1372 = vadd.f32 0.0, %v1371
      %1373 = vdwg.mxu0
      %v1374 = vadd.f32 %v1282, %v1327
      %v1375 = vadd.f32 %v1283, %v1330
      %v1376 = vadd.f32 %v1284, %v1333
      %v1377 = vadd.f32 %v1285, %v1336
      %v1378 = vadd.f32 %v1286, %v1339
      %v1379 = vadd.f32 %v1287, %v1342
      %v1380 = vadd.f32 %v1288, %v1345
      %v1381 = vadd.f32 %v1289, %v1348
      %v1382 = vadd.f32 %v1290, %v1351
      %v1383 = vadd.f32 %v1291, %v1354
      %v1384 = vadd.f32 %v1292, %v1357
      %v1385 = vadd.f32 %v1293, %v1360
      %v1386 = vadd.f32 %v1294, %v1363
      %v1387 = vadd.f32 %v1295, %v1366
      %v1388 = vadd.f32 %v1296, %v1369
      %v1389 = vadd.f32 %v1297, %v1372
      %v1390 = vld [vmem:[%s3] sm:$0x1]
      %v1392 = vperm.slane %v1390, 0
      %v1394 = vmul.f32 %v1374, %v1392
      %v1395 = vmul.f32 %v1375, %v1392
      %v1396 = vmul.f32 %v1376, %v1392
      %v1397 = vmul.f32 %v1377, %v1392
      %v1398 = vmul.f32 %v1378, %v1392
      %v1399 = vmul.f32 %v1379, %v1392
      %v1400 = vmul.f32 %v1380, %v1392
      %v1401 = vmul.f32 %v1381, %v1392
      %v1402 = vmul.f32 %v1382, %v1392
      %v1403 = vmul.f32 %v1383, %v1392
      %v1404 = vmul.f32 %v1384, %v1392
      %v1405 = vmul.f32 %v1385, %v1392
      %v1406 = vmul.f32 %v1386, %v1392
      %v1407 = vmul.f32 %v1387, %v1392
      %v1408 = vmul.f32 %v1388, %v1392
      %v1409 = vmul.f32 %v1389, %v1392
      %v1410 = vld [vmem:[%s4] sm:$0x1]
      %v1412 = vperm.slane %v1410, 0
      %v1414 = vadd.f32 %v1394, %v1412
      %v1415 = vadd.f32 %v1395, %v1412
      %v1416 = vadd.f32 %v1396, %v1412
      %v1417 = vadd.f32 %v1397, %v1412
      %v1418 = vadd.f32 %v1398, %v1412
      %v1419 = vadd.f32 %v1399, %v1412
      %v1420 = vadd.f32 %v1400, %v1412
      %v1421 = vadd.f32 %v1401, %v1412
      %v1422 = vadd.f32 %v1402, %v1412
      %v1423 = vadd.f32 %v1403, %v1412
      %v1424 = vadd.f32 %v1404, %v1412
      %v1425 = vadd.f32 %v1405, %v1412
      %v1426 = vadd.f32 %v1406, %v1412
      %v1427 = vadd.f32 %v1407, %v1412
      %v1428 = vadd.f32 %v1408, %v1412
      %v1429 = vadd.f32 %v1409, %v1412
      %v1430 = vmax.f32 %v1414, 0.0
      %v1431 = vmax.f32 %v1415, 0.0
      %v1432 = vmax.f32 %v1416, 0.0
      %v1433 = vmax.f32 %v1417, 0.0
      %v1434 = vmax.f32 %v1418, 0.0
      %v1435 = vmax.f32 %v1419, 0.0
      %v1436 = vmax.f32 %v1420, 0.0
      %v1437 = vmax.f32 %v1421, 0.0
      %v1438 = vmax.f32 %v1422, 0.0
      %v1439 = vmax.f32 %v1423, 0.0
      %v1440 = vmax.f32 %v1424, 0.0
      %v1441 = vmax.f32 %v1425, 0.0
      %v1442 = vmax.f32 %v1426, 0.0
      %v1443 = vmax.f32 %v1427, 0.0
      %v1444 = vmax.f32 %v1428, 0.0
      %v1445 = vmax.f32 %v1429, 0.0
      %vm1446 = vcmask 261120
      %1447 = vst.msk [vmem:[%s343] sm:$0xff] %vm1446, %v1430
      %1448 = vst.msk [vmem:[%s343 + $0x8] sm:$0xff] %vm1446, %v1431
      %1449 = vst.msk [vmem:[%s343 + $0x10] sm:$0xff] %vm1446, %v1432
      %1450 = vst.msk [vmem:[%s343 + $0x18] sm:$0xff] %vm1446, %v1433
      %1451 = vst.msk [vmem:[%s343 + $0x20] sm:$0xff] %vm1446, %v1434
      %1452 = vst.msk [vmem:[%s343 + $0x28] sm:$0xff] %vm1446, %v1435
      %1453 = vst.msk [vmem:[%s343 + $0x30] sm:$0xff] %vm1446, %v1436
      %1454 = vst.msk [vmem:[%s343 + $0x38] sm:$0xff] %vm1446, %v1437
      %1455 = vst.msk [vmem:[%s343 + $0x40] sm:$0xff] %vm1446, %v1438
      %1456 = vst.msk [vmem:[%s343 + $0x48] sm:$0xff] %vm1446, %v1439
      %1457 = vst.msk [vmem:[%s343 + $0x50] sm:$0xff] %vm1446, %v1440
      %1458 = vst.msk [vmem:[%s343 + $0x58] sm:$0xff] %vm1446, %v1441
      %1459 = vst.msk [vmem:[%s343 + $0x60] sm:$0xff] %vm1446, %v1442
      %1460 = vst.msk [vmem:[%s343 + $0x68] sm:$0xff] %vm1446, %v1443
      %1461 = vst.msk [vmem:[%s343 + $0x70] sm:$0xff] %vm1446, %v1444
      %1462 = vst.msk [vmem:[%s343 + $0x78] sm:$0xff] %vm1446, %v1445
      %s1463 = smul.u32 16, %s21
      %p1464 = scmp.lt.s32.totalorder %s20, 1
      %s1465 = scalar_select %p1464, %s20, 1
      %p1466 = scmp.lt.s32.totalorder %s1463, 31
      %s1467 = scalar_select %p1466, %s1463, 31
      %s1468 = smul.addr %s1465, 32
      %s1469 = sadd.s32 %s1467, %s1468
      %s1470 = smul.addr %s1469, 8
      %s1471 = scalar_lea.vmem %s5, %s1470
      // Predicated region
      $region41: #{tpu_custom_call.1} parent=39 // pred_check
        %p1472 = pneg %p171
      $region42: #{tpu_custom_call.1} parent=39 // pred_check_branch
        %1474 = sbr.rel (%p1472) target = $region44
      $region43: #{tpu_custom_call.1} parent=39 // pred_region
        %s1475 = smul.u32 16, %s21
      $region44: #{tpu_custom_call.1} parent=39 // pred_fallthru
        _
    $region40: #{tpu_custom_call.1} parent=5 // pred_fallthru
      _
    %p1476 = scmp.le.s32.totalorder 2, %s11
    // Predicated region
    $region45: #{tpu_custom_call.1} parent=5 // pred_check
      %p1477 = pneg %p1476
    $region46: #{tpu_custom_call.1} parent=5 // pred_check_branch
      %1479 = sbr.rel (%p1477) target = $region48
    $region47: #{tpu_custom_call.1} parent=5 // pred_region
      %s1480 = ssub.s32 %s11, 2
      // Predicated region
      $region49: #{tpu_custom_call.1} parent=47 // pred_check
        %p1481 = pneg %p177
      $region50: #{tpu_custom_call.1} parent=47 // pred_check_branch
        %1483 = sbr.rel (%p1481) target = $region52
      $region51: #{tpu_custom_call.1} parent=47 // pred_region
        %s1484 = smul.u32 16, %s23
        %p1485 = scmp.lt.s32.totalorder %s22, 1
        %s1486 = scalar_select %p1485, %s22, 1
        %p1487 = scmp.lt.s32.totalorder %s1484, 31
        %s1488 = scalar_select %p1487, %s1484, 31
        %s1489 = smul.addr %s1486, 32
        %s1490 = sadd.s32 %s1488, %s1489
        %s1491 = smul.addr %s1490, 8
        %s1492 = scalar_lea.vmem %s5, %s1491
      $region52: #{tpu_custom_call.1} parent=47 // pred_fallthru
        _
    $region48: #{tpu_custom_call.1} parent=5 // pred_fallthru
      _
  $region6: #{tpu_custom_call.1} parent=0 // loop_footer
    %s15 = sadd.s32 1, %s11
  $region7: #{tpu_custom_call.1} parent=0 // loop_footer_branch
    %10 = sbr.rel target = $region3
  $region8: #{tpu_custom_call.1} parent=0 // loop_exit
    _

</llo_original>
